<compile_context>
chip_gen: v7x
topology: tpu7x:2x2x1
jax: 0.10.0
libtpu: 0.0.40
codegen_flags: <defaults>
</compile_context>

<pallas_src>
import functools
import math

import jax
import jax.numpy as jnp
from jax import lax
from jax.experimental import pallas as pl
from jax.experimental.pallas import tpu as pltpu


def _round_up(x, m):
    return (x + m - 1) // m * m


# ----------------------------------------------------------------------------
# generation-aware VMEM budget / tile sizes
# ----------------------------------------------------------------------------
def _tpu_vmem_capacity_bytes():
    cap = 128 << 20  # v5e / v6e default
    try:
        info = pltpu.get_tpu_info()
        cap = int(getattr(info, "vmem_capacity_bytes", cap))
    except Exception:
        pass
    return cap


_VMEM_CAP = _tpu_vmem_capacity_bytes()
# ~3/4 of physical VMEM, capped at 96 MiB: 96 MiB on v5e/v6e, 48 MiB on v7x.
_VMEM_LIMIT = max(32 << 20, min(96 << 20, (_VMEM_CAP * 3) // 4))
_DEFAULT_TILE_V = 1024 if _VMEM_CAP <= (64 << 20) else 2048


def _weight_spec(shape, index_map):
    """Constant-index weight block: single-buffer it (2nd buffer = pure waste)."""
    try:
        return pl.BlockSpec(shape, index_map, pipeline_mode=pl.Buffered(1))
    except Exception:  # fallback if pipeline_mode is unavailable
        return pl.BlockSpec(shape, index_map)


# ----------------------------------------------------------------------------
# in-kernel helpers (shared with the pure-JAX reference)
# ----------------------------------------------------------------------------
def _layernorm(x, scale, shift, eps=1e-5):
    # matches the book's LayerNorm (unbiased=False); rsqrt -> EUP slot
    mean = jnp.mean(x, axis=-1, keepdims=True)
    var = jnp.mean((x - mean) ** 2, axis=-1, keepdims=True)
    return scale * ((x - mean) * lax.rsqrt(var + eps)) + shift


def _gelu(x):
    # tanh-approximation GELU used by the book's GELU module
    c = math.sqrt(2.0 / math.pi)
    return 0.5 * x * (1.0 + jnp.tanh(c * (x + 0.044715 * x * x * x)))


# ----------------------------------------------------------------------------
# Transformer block kernel, grid = (batch, query-tiles)
#   norm1 -> causal MHA -> +res -> norm2 -> FF -> +res   (on one TQ row tile)
# ----------------------------------------------------------------------------
def _block_kernel(xf_ref, xq_ref, ln1s, ln1b, wq, wk, wv, wo, bo,
                  ln2s, ln2b, w1, b1, w2, b2, o_ref,
                  k_cache, v_cache, ctx_ref, *, n_heads, head_dim, q_tile):
    qi = pl.program_id(1)
    H, hd, TQ = n_heads, head_dim, q_tile
    S = xf_ref.shape[1]

    # K / V for the whole sequence: computed once per batch row (qi == 0) with
    # full-width (E,E) matmuls, kept resident in VMEM scratch across q-tiles.
    @pl.when(qi == 0)
    def _():
        hf = _layernorm(xf_ref[0], ln1s[...], ln1b[...]).astype(jnp.bfloat16)
        k_cache[...] = jnp.dot(hf, wk[...],
                               preferred_element_type=jnp.float32).astype(jnp.bfloat16)
        v_cache[...] = jnp.dot(hf, wv[...],
                               preferred_element_type=jnp.float32).astype(jnp.bfloat16)

    x_q = xq_ref[0]                                                   # (TQ, E) f32
    h_q = _layernorm(x_q, ln1s[...], ln1b[...]).astype(jnp.bfloat16)
    q = jnp.dot(h_q, wq[...], preferred_element_type=jnp.float32)     # (TQ, E), K=E

    # additive causal bias for this query tile, built once (shared by all heads)
    row = qi * TQ + lax.broadcasted_iota(jnp.int32, (TQ, S), 0)
    col = lax.broadcasted_iota(jnp.int32, (TQ, S), 1)
    causal_bias = jnp.where(col <= row, jnp.float32(0.0), jnp.float32(-1e30))

    inv_sqrt_hd = jnp.float32(1.0 / math.sqrt(hd))
    # scores / context are inherently per-head; stage ctx into a (TQ, E) scratch
    # so the output projection below is one full-width K=E matmul.
    for hh in range(H):
        lo = hh * hd
        qh = q[:, lo:lo + hd].astype(jnp.bfloat16)                    # (TQ, hd)
        kh = k_cache[:, lo:lo + hd]                                   # (S, hd)
        vh = v_cache[:, lo:lo + hd]
        s = jnp.einsum("qd,kd->qk", qh, kh,
                       preferred_element_type=jnp.float32) * inv_sqrt_hd
        s = s + causal_bias
        s = s - jnp.max(s, axis=-1, keepdims=True)
        p = jnp.exp(s)
        p = p * pl.reciprocal(jnp.sum(p, axis=-1, keepdims=True), approx=True)
        ctx_ref[:, lo:lo + hd] = jnp.dot(
            p.astype(jnp.bfloat16), vh,
            preferred_element_type=jnp.float32).astype(jnp.bfloat16)

    # single full-width output projection (K = E) + residual 1
    attn = jnp.dot(ctx_ref[...], wo[...],
                   preferred_element_type=jnp.float32) + bo[...]
    x1 = x_q + attn

    # feed-forward on this TQ row tile only ((TQ,F) GELU intermediate, not (S,F))
    h2 = _layernorm(x1, ln2s[...], ln2b[...]).astype(jnp.bfloat16)
    ff = jnp.dot(h2, w1[...], preferred_element_type=jnp.float32) + b1[...]
    ff = _gelu(ff).astype(jnp.bfloat16)
    ff = jnp.dot(ff, w2[...], preferred_element_type=jnp.float32) + b2[...]

    o_ref[0] = x1 + ff                                                # residual 2


def transformer_block(x, p, n_heads, q_tile=128):
    B, S, E = x.shape
    H = n_heads
    hd = E // H
    F = p["w1"].shape[1]
    TQ = min(q_tile, S)
    nq = pl.cdiv(S, TQ)

    def const(shape):
        zeros = (0,) * len(shape)
        return _weight_spec(shape, lambda b, q, _z=zeros: _z)

    return pl.pallas_call(
        functools.partial(_block_kernel, n_heads=H, head_dim=hd, q_tile=TQ),
        out_shape=jax.ShapeDtypeStruct((B, S, E), jnp.float32),
        grid_spec=pltpu.PrefetchScalarGridSpec(
            num_scalar_prefetch=0,
            grid=(B, nq),
            in_specs=[
                pl.BlockSpec((1, S, E), lambda b, q: (b, 0, 0)),      # full row (K/V src)
                pl.BlockSpec((1, TQ, E), lambda b, q: (b, q, 0)),     # query tile
                const((1, E)), const((1, E)),                         # ln1
                const((E, E)), const((E, E)), const((E, E)),          # wq wk wv (fused)
                const((E, E)), const((1, E)),                         # wo bo
                const((1, E)), const((1, E)),                         # ln2
                const((E, F)), const((1, F)),                         # w1 b1
                const((F, E)), const((1, E)),                         # w2 b2
            ],
            out_specs=pl.BlockSpec((1, TQ, E), lambda b, q: (b, q, 0)),
            scratch_shapes=[
                pltpu.VMEM((S, E), jnp.bfloat16),                     # K cache
                pltpu.VMEM((S, E), jnp.bfloat16),                     # V cache
                pltpu.VMEM((TQ, E), jnp.bfloat16),                    # per-head ctx staging
            ]),
        compiler_params=pltpu.CompilerParams(
            dimension_semantics=("parallel", "arbitrary"),
            vmem_limit_bytes=_VMEM_LIMIT),
    )(x, x, p["ln1_s"], p["ln1_b"], p["wq"], p["wk"], p["wv"], p["wo"], p["bo"],
      p["ln2_s"], p["ln2_b"], p["w1"], p["b1"], p["w2"], p["b2"])


# ----------------------------------------------------------------------------
# Final layernorm kernel (runs once; bf16 output halves hidden DMA into the head)
# ----------------------------------------------------------------------------
def _lnf_kernel(x_ref, s_ref, b_ref, o_ref):
    o_ref[0] = _layernorm(x_ref[0], s_ref[...], b_ref[...]).astype(jnp.bfloat16)


def final_layernorm(x, lnf_s, lnf_b):
    B, S, E = x.shape
    return pl.pallas_call(
        _lnf_kernel,
        out_shape=jax.ShapeDtypeStruct((B, S, E), jnp.bfloat16),
        grid_spec=pltpu.PrefetchScalarGridSpec(
            num_scalar_prefetch=0,
            grid=(B,),
            in_specs=[
                pl.BlockSpec((1, S, E), lambda b: (b, 0, 0)),
                _weight_spec((1, E), lambda b: (0, 0)),
                _weight_spec((1, E), lambda b: (0, 0)),
            ],
            out_specs=pl.BlockSpec((1, S, E), lambda b: (b, 0, 0))),
        compiler_params=pltpu.CompilerParams(
            dimension_semantics=("parallel",),
            vmem_limit_bytes=_VMEM_LIMIT),
    )(x, lnf_s, lnf_b)


# ----------------------------------------------------------------------------
# LM head kernel (vocab-tiled; w_out already lane-padded once at init)
# ----------------------------------------------------------------------------
def _head_kernel(h_ref, w_ref, o_ref):
    o_ref[0] = jnp.dot(h_ref[0], w_ref[...], preferred_element_type=jnp.float32)


def lm_head(h_bf16, w_out, tile_v=None):
    B, S, E = h_bf16.shape
    Vp = w_out.shape[1]                      # multiple of 128 (padded at init)
    if tile_v is None:
        tile_v = _DEFAULT_TILE_V
    tile_v = max(128, (min(tile_v, Vp) // 128) * 128)   # lane-dense tile
    nv = pl.cdiv(Vp, tile_v)

    return pl.pallas_call(
        _head_kernel,
        out_shape=jax.ShapeDtypeStruct((B, S, Vp), jnp.float32),
        grid_spec=pltpu.PrefetchScalarGridSpec(
            num_scalar_prefetch=0,
            grid=(B, nv),
            in_specs=[
                pl.BlockSpec((1, S, E), lambda b, j: (b, 0, 0)),
                pl.BlockSpec((E, tile_v), lambda b, j: (0, j)),
            ],
            out_specs=pl.BlockSpec((1, S, tile_v), lambda b, j: (b, 0, j))),
        compiler_params=pltpu.CompilerParams(
            dimension_semantics=("parallel", "parallel"),
            vmem_limit_bytes=_VMEM_LIMIT),
    )(h_bf16, w_out)


# ----------------------------------------------------------------------------
# Full GPT forward (embedding glue in JAX, hot path in Pallas)
# ----------------------------------------------------------------------------
def gpt_forward(input_ids, params, cfg):
    B, S = input_ids.shape
    x = params["tok_emb"][input_ids] + params["pos_emb"][:S][None, :, :]
    # drop_emb: identity (eval mode)
    for layer_p in params["blocks"]:
        x = transformer_block(x, layer_p, cfg["n_heads"])
    h = final_layernorm(x, params["lnf_s"], params["lnf_b"])
    logits = lm_head(h, params["w_out"])
    return logits[..., :cfg["vocab_size"]]


# ----------------------------------------------------------------------------
# Pure-JAX reference (same math / same bf16 cast points) for correctness check
# ----------------------------------------------------------------------------
def gpt_forward_ref(input_ids, params, cfg):
    n_heads, V = cfg["n_heads"], cfg["vocab_size"]
    B, S = input_ids.shape
    x = params["tok_emb"][input_ids] + params["pos_emb"][:S][None, :, :]
    bias = jnp.where(jnp.tril(jnp.ones((S, S), dtype=bool)),
                     0.0, -1e30).astype(jnp.float32)
    for p in params["blocks"]:
        E = x.shape[-1]
        hd = E // n_heads
        h = _layernorm(x, p["ln1_s"], p["ln1_b"]).astype(jnp.bfloat16)

        def proj(w):
            y = jnp.einsum("bse,ef->bsf", h, w, preferred_element_type=jnp.float32)
            y = y.reshape(B, S, n_heads, hd)
            return jnp.transpose(y, (0, 2, 1, 3)).astype(jnp.bfloat16)   # (B,H,S,hd)

        q, k, v = proj(p["wq"]), proj(p["wk"]), proj(p["wv"])
        s = jnp.einsum("bhqd,bhkd->bhqk", q, k,
                       preferred_element_type=jnp.float32) / math.sqrt(hd)
        s = s + bias[None, None]
        p_attn = jax.nn.softmax(s, axis=-1)
        ctx = jnp.einsum("bhqk,bhkd->bhqd", p_attn.astype(jnp.bfloat16), v,
                         preferred_element_type=jnp.float32)
        ctx = jnp.transpose(ctx, (0, 2, 1, 3)).reshape(B, S, E).astype(jnp.bfloat16)
        attn = jnp.einsum("bse,ef->bsf", ctx, p["wo"],
                          preferred_element_type=jnp.float32) + p["bo"]
        x1 = x + attn
        h2 = _layernorm(x1, p["ln2_s"], p["ln2_b"]).astype(jnp.bfloat16)
        ff = jnp.einsum("bse,ef->bsf", h2, p["w1"],
                        preferred_element_type=jnp.float32) + p["b1"]
        ff = _gelu(ff).astype(jnp.bfloat16)
        ff = jnp.einsum("bsf,fe->bse", ff, p["w2"],
                        preferred_element_type=jnp.float32) + p["b2"]
        x = x1 + ff
    h = _layernorm(x, params["lnf_s"], params["lnf_b"]).astype(jnp.bfloat16)
    logits = jnp.einsum("bse,ev->bsv", h, params["w_out"],
                        preferred_element_type=jnp.float32)
    return logits[..., :V]


# ----------------------------------------------------------------------------
# Deterministic parameter init (matmul weights in bf16, fused (E,E) QKV/WO,
# w_out lane-padded ONCE here)
# ----------------------------------------------------------------------------
def init_params(key, cfg):
    V, C, E = cfg["vocab_size"], cfg["context_length"], cfg["emb_dim"]
    F = 4 * E
    V_pad = _round_up(V, 128)
    keys = iter(jax.random.split(key, 3 + 6 * cfg["n_layers"]))

    def nrm(k, shp, dtype=jnp.float32):
        return (0.02 * jax.random.normal(k, shp, dtype=jnp.float32)).astype(dtype)

    w_out = nrm(next(keys), (E, V), jnp.bfloat16)
    if V_pad != V:
        w_out = jnp.pad(w_out, ((0, 0), (0, V_pad - V)))   # padded once, not per call

    params = {
        "tok_emb": nrm(next(keys), (V, E)),
        "pos_emb": nrm(next(keys), (C, E)),
        "lnf_s": jnp.ones((1, E), jnp.float32),
        "lnf_b": jnp.zeros((1, E), jnp.float32),
        "w_out": w_out,
        "blocks": [],
    }
    for _ in range(cfg["n_layers"]):
        params["blocks"].append({
            "ln1_s": jnp.ones((1, E), jnp.float32),
            "ln1_b": jnp.zeros((1, E), jnp.float32),
            "wq": nrm(next(keys), (E, E), jnp.bfloat16),
            "wk": nrm(next(keys), (E, E), jnp.bfloat16),
            "wv": nrm(next(keys), (E, E), jnp.bfloat16),
            "wo": nrm(next(keys), (E, E), jnp.bfloat16),
            "bo": jnp.zeros((1, E), jnp.float32),
            "ln2_s": jnp.ones((1, E), jnp.float32),
            "ln2_b": jnp.zeros((1, E), jnp.float32),
            "w1": nrm(next(keys), (E, F), jnp.bfloat16),
            "b1": jnp.zeros((1, F), jnp.float32),
            "w2": nrm(next(keys), (F, E), jnp.bfloat16),
            "b2": jnp.zeros((1, E), jnp.float32),
        })
    return params


if __name__ == "__main__":
    cfg = dict(vocab_size=128, context_length=16, emb_dim=32,
               n_heads=4, n_layers=2, drop_rate=0.0, qkv_bias=False)
    B, S = 2, 8

    key = jax.random.PRNGKey(0)
    pkey, ikey = jax.random.split(key)
    params = init_params(pkey, cfg)
    input_ids = jax.random.randint(ikey, (B, S), 0, cfg["vocab_size"], dtype=jnp.int32)

    logits = jax.block_until_ready(gpt_forward(input_ids, params, cfg))
    ref = jax.block_until_ready(gpt_forward_ref(input_ids, params, cfg))

    assert logits.shape == (B, S, cfg["vocab_size"]), logits.shape
    max_err = float(jnp.max(jnp.abs(logits - ref)))
    assert jnp.allclose(logits, ref, atol=5e-3, rtol=5e-2), max_err

    print("KERNEL_OK")
</pallas_src>

<mosaic_0001>
module attributes {stable_mosaic.version = 11 : i64} {
  func.func @_block_kernel(%arg0: i32, %arg1: i32, %arg2: memref<1x8x32xf32, #tpu.memory_space<vmem>>, %arg3: memref<1x8x32xf32, #tpu.memory_space<vmem>>, %arg4: memref<1x32xf32, #tpu.memory_space<vmem>>, %arg5: memref<1x32xf32, #tpu.memory_space<vmem>>, %arg6: memref<32x32xbf16, #tpu.memory_space<vmem>>, %arg7: memref<32x32xbf16, #tpu.memory_space<vmem>>, %arg8: memref<32x32xbf16, #tpu.memory_space<vmem>>, %arg9: memref<32x32xbf16, #tpu.memory_space<vmem>>, %arg10: memref<1x32xf32, #tpu.memory_space<vmem>>, %arg11: memref<1x32xf32, #tpu.memory_space<vmem>>, %arg12: memref<1x32xf32, #tpu.memory_space<vmem>>, %arg13: memref<32x128xbf16, #tpu.memory_space<vmem>>, %arg14: memref<1x128xf32, #tpu.memory_space<vmem>>, %arg15: memref<128x32xbf16, #tpu.memory_space<vmem>>, %arg16: memref<1x32xf32, #tpu.memory_space<vmem>>, %arg17: memref<1x8x32xf32, #tpu.memory_space<vmem>>, %arg18: memref<8x32xbf16, #tpu.memory_space<vmem>>, %arg19: memref<8x32xbf16, #tpu.memory_space<vmem>>, %arg20: memref<8x32xbf16, #tpu.memory_space<vmem>>) attributes {dimension_semantics = [#tpu.dimension_semantics<parallel>, #tpu.dimension_semantics<arbitrary>], iteration_bounds = array<i64: 2, 1>, scalar_prefetch = 0 : i64, scratch_operands = 3 : i64, tpu.core_type = #tpu.core_type<tc>, window_params = [{transform_indices = @transform_0, window_bounds = array<i64: 1, 8, 32>}, {transform_indices = @transform_1, window_bounds = array<i64: 1, 8, 32>}, {pipeline_mode = #tpu.pipeline_mode<synchronous>, transform_indices = @transform_2, window_bounds = array<i64: 1, 32>}, {pipeline_mode = #tpu.pipeline_mode<synchronous>, transform_indices = @transform_3, window_bounds = array<i64: 1, 32>}, {pipeline_mode = #tpu.pipeline_mode<synchronous>, transform_indices = @transform_4, window_bounds = array<i64: 32, 32>}, {pipeline_mode = #tpu.pipeline_mode<synchronous>, transform_indices = @transform_5, window_bounds = array<i64: 32, 32>}, {pipeline_mode = #tpu.pipeline_mode<synchronous>, transform_indices = @transform_6, window_bounds = array<i64: 32, 32>}, {pipeline_mode = #tpu.pipeline_mode<synchronous>, transform_indices = @transform_7, window_bounds = array<i64: 32, 32>}, {pipeline_mode = #tpu.pipeline_mode<synchronous>, transform_indices = @transform_8, window_bounds = array<i64: 1, 32>}, {pipeline_mode = #tpu.pipeline_mode<synchronous>, transform_indices = @transform_9, window_bounds = array<i64: 1, 32>}, {pipeline_mode = #tpu.pipeline_mode<synchronous>, transform_indices = @transform_10, window_bounds = array<i64: 1, 32>}, {pipeline_mode = #tpu.pipeline_mode<synchronous>, transform_indices = @transform_11, window_bounds = array<i64: 32, 128>}, {pipeline_mode = #tpu.pipeline_mode<synchronous>, transform_indices = @transform_12, window_bounds = array<i64: 1, 128>}, {pipeline_mode = #tpu.pipeline_mode<synchronous>, transform_indices = @transform_13, window_bounds = array<i64: 128, 32>}, {pipeline_mode = #tpu.pipeline_mode<synchronous>, transform_indices = @transform_14, window_bounds = array<i64: 1, 32>}, {transform_indices = @transform_15, window_bounds = array<i64: 1, 8, 32>}]} {
    %c0_i32 = arith.constant 0 : i32
    %0 = arith.cmpi eq, %arg1, %c0_i32 : i32
    %1 = arith.extui %0 : i1 to i32
    %c0_i32_0 = arith.constant 0 : i32
    %2 = arith.cmpi ne, %1, %c0_i32_0 : i32
    scf.if %2 {
      %c0_90 = arith.constant 0 : index
      %c0_91 = arith.constant 0 : index
      %c0_92 = arith.constant 0 : index
      %189 = vector.load %arg2[%c0_90, %c0_91, %c0_92] : memref<1x8x32xf32, #tpu.memory_space<vmem>>, vector<1x8x32xf32>
      %190 = vector.shape_cast %189 : vector<1x8x32xf32> to vector<8x32xf32>
      %c0_93 = arith.constant 0 : index
      %c0_94 = arith.constant 0 : index
      %191 = vector.load %arg4[%c0_93, %c0_94] : memref<1x32xf32, #tpu.memory_space<vmem>>, vector<1x32xf32>
      %c0_95 = arith.constant 0 : index
      %c0_96 = arith.constant 0 : index
      %192 = vector.load %arg5[%c0_95, %c0_96] : memref<1x32xf32, #tpu.memory_space<vmem>>, vector<1x32xf32>
      %cst_97 = arith.constant dense<0.000000e+00> : vector<8xf32>
      %193 = vector.multi_reduction <add>, %190, %cst_97 [1] : vector<8x32xf32> to vector<8xf32>
      %194 = vector.shape_cast %193 : vector<8xf32> to vector<8x1xf32>
      %cst_98 = arith.constant 3.200000e+01 : f32
      %195 = vector.broadcast %cst_98 : f32 to vector<8x1xf32>
      %196 = arith.divf %194, %195 : vector<8x1xf32>
      %197 = vector.broadcast %196 : vector<8x1xf32> to vector<8x32xf32>
      %198 = arith.subf %190, %197 : vector<8x32xf32>
      %199 = arith.mulf %198, %198 : vector<8x32xf32>
      %cst_99 = arith.constant dense<0.000000e+00> : vector<8xf32>
      %200 = vector.multi_reduction <add>, %199, %cst_99 [1] : vector<8x32xf32> to vector<8xf32>
      %201 = vector.shape_cast %200 : vector<8xf32> to vector<8x1xf32>
      %cst_100 = arith.constant 3.200000e+01 : f32
      %202 = vector.broadcast %cst_100 : f32 to vector<8x1xf32>
      %203 = arith.divf %201, %202 : vector<8x1xf32>
      %204 = vector.broadcast %196 : vector<8x1xf32> to vector<8x32xf32>
      %205 = arith.subf %190, %204 : vector<8x32xf32>
      %cst_101 = arith.constant 9.99999974E-6 : f32
      %206 = vector.broadcast %cst_101 : f32 to vector<8x1xf32>
      %207 = arith.addf %203, %206 : vector<8x1xf32>
      %208 = math.rsqrt %207 : vector<8x1xf32>
      %209 = vector.broadcast %208 : vector<8x1xf32> to vector<8x32xf32>
      %210 = arith.mulf %205, %209 : vector<8x32xf32>
      %211 = vector.broadcast %191 : vector<1x32xf32> to vector<8x32xf32>
      %212 = arith.mulf %211, %210 : vector<8x32xf32>
      %213 = vector.broadcast %192 : vector<1x32xf32> to vector<8x32xf32>
      %214 = arith.addf %212, %213 : vector<8x32xf32>
      %215 = arith.truncf %214 : vector<8x32xf32> to vector<8x32xbf16>
      %c0_102 = arith.constant 0 : index
      %c0_103 = arith.constant 0 : index
      %216 = vector.load %arg7[%c0_102, %c0_103] : memref<32x32xbf16, #tpu.memory_space<vmem>>, vector<32x32xbf16>
      %cst_104 = arith.constant dense<0.000000e+00> : vector<8x32xf32>
      %217 = tpu.matmul %215, %216, %cst_104 {dimension_numbers = #tpu.dot_dimension_numbers<[1], [0], [0], [1], [0, 0, 1, 1], [], []>} : vector<8x32xbf16>, vector<32x32xbf16>, vector<8x32xf32> -> vector<8x32xf32>
      %218 = arith.truncf %217 : vector<8x32xf32> to vector<8x32xbf16>
      %c0_105 = arith.constant 0 : index
      %c0_106 = arith.constant 0 : index
      %219 = vector.load %arg18[%c0_105, %c0_106] : memref<8x32xbf16, #tpu.memory_space<vmem>>, vector<8x32xbf16>
      tpu.vector_store %arg18[%c0_105, %c0_106], %218 {strides = array<i32>} : memref<8x32xbf16, #tpu.memory_space<vmem>>, vector<8x32xbf16>,
      %c0_107 = arith.constant 0 : index
      %c0_108 = arith.constant 0 : index
      %220 = vector.load %arg8[%c0_107, %c0_108] : memref<32x32xbf16, #tpu.memory_space<vmem>>, vector<32x32xbf16>
      %cst_109 = arith.constant dense<0.000000e+00> : vector<8x32xf32>
      %221 = tpu.matmul %215, %220, %cst_109 {dimension_numbers = #tpu.dot_dimension_numbers<[1], [0], [0], [1], [0, 0, 1, 1], [], []>} : vector<8x32xbf16>, vector<32x32xbf16>, vector<8x32xf32> -> vector<8x32xf32>
      %222 = arith.truncf %221 : vector<8x32xf32> to vector<8x32xbf16>
      %c0_110 = arith.constant 0 : index
      %c0_111 = arith.constant 0 : index
      %223 = vector.load %arg19[%c0_110, %c0_111] : memref<8x32xbf16, #tpu.memory_space<vmem>>, vector<8x32xbf16>
      tpu.vector_store %arg19[%c0_110, %c0_111], %222 {strides = array<i32>} : memref<8x32xbf16, #tpu.memory_space<vmem>>, vector<8x32xbf16>,
    } else {
    }
    %c0 = arith.constant 0 : index
    %c0_1 = arith.constant 0 : index
    %c0_2 = arith.constant 0 : index
    %3 = vector.load %arg3[%c0, %c0_1, %c0_2] : memref<1x8x32xf32, #tpu.memory_space<vmem>>, vector<1x8x32xf32>
    %4 = vector.shape_cast %3 : vector<1x8x32xf32> to vector<8x32xf32>
    %c0_3 = arith.constant 0 : index
    %c0_4 = arith.constant 0 : index
    %5 = vector.load %arg4[%c0_3, %c0_4] : memref<1x32xf32, #tpu.memory_space<vmem>>, vector<1x32xf32>
    %c0_5 = arith.constant 0 : index
    %c0_6 = arith.constant 0 : index
    %6 = vector.load %arg5[%c0_5, %c0_6] : memref<1x32xf32, #tpu.memory_space<vmem>>, vector<1x32xf32>
    %cst = arith.constant dense<0.000000e+00> : vector<8xf32>
    %7 = vector.multi_reduction <add>, %4, %cst [1] : vector<8x32xf32> to vector<8xf32>
    %8 = vector.shape_cast %7 : vector<8xf32> to vector<8x1xf32>
    %cst_7 = arith.constant 3.200000e+01 : f32
    %9 = vector.broadcast %cst_7 : f32 to vector<8x1xf32>
    %10 = arith.divf %8, %9 : vector<8x1xf32>
    %11 = vector.broadcast %10 : vector<8x1xf32> to vector<8x32xf32>
    %12 = arith.subf %4, %11 : vector<8x32xf32>
    %13 = arith.mulf %12, %12 : vector<8x32xf32>
    %cst_8 = arith.constant dense<0.000000e+00> : vector<8xf32>
    %14 = vector.multi_reduction <add>, %13, %cst_8 [1] : vector<8x32xf32> to vector<8xf32>
    %15 = vector.shape_cast %14 : vector<8xf32> to vector<8x1xf32>
    %cst_9 = arith.constant 3.200000e+01 : f32
    %16 = vector.broadcast %cst_9 : f32 to vector<8x1xf32>
    %17 = arith.divf %15, %16 : vector<8x1xf32>
    %18 = vector.broadcast %10 : vector<8x1xf32> to vector<8x32xf32>
    %19 = arith.subf %4, %18 : vector<8x32xf32>
    %cst_10 = arith.constant 9.99999974E-6 : f32
    %20 = vector.broadcast %cst_10 : f32 to vector<8x1xf32>
    %21 = arith.addf %17, %20 : vector<8x1xf32>
    %22 = math.rsqrt %21 : vector<8x1xf32>
    %23 = vector.broadcast %22 : vector<8x1xf32> to vector<8x32xf32>
    %24 = arith.mulf %19, %23 : vector<8x32xf32>
    %25 = vector.broadcast %5 : vector<1x32xf32> to vector<8x32xf32>
    %26 = arith.mulf %25, %24 : vector<8x32xf32>
    %27 = vector.broadcast %6 : vector<1x32xf32> to vector<8x32xf32>
    %28 = arith.addf %26, %27 : vector<8x32xf32>
    %29 = arith.truncf %28 : vector<8x32xf32> to vector<8x32xbf16>
    %c0_11 = arith.constant 0 : index
    %c0_12 = arith.constant 0 : index
    %30 = vector.load %arg6[%c0_11, %c0_12] : memref<32x32xbf16, #tpu.memory_space<vmem>>, vector<32x32xbf16>
    %cst_13 = arith.constant dense<0.000000e+00> : vector<8x32xf32>
    %31 = tpu.matmul %29, %30, %cst_13 {dimension_numbers = #tpu.dot_dimension_numbers<[1], [0], [0], [1], [0, 0, 1, 1], [], []>} : vector<8x32xbf16>, vector<32x32xbf16>, vector<8x32xf32> -> vector<8x32xf32>
    %c8_i32 = arith.constant 8 : i32
    %32 = arith.muli %arg1, %c8_i32 : i32
    %33 = tpu.iota {dimensions = array<i32: 0>} : vector<8x8xi32>
    %34 = vector.broadcast %32 : i32 to vector<8x8xi32>
    %35 = arith.addi %34, %33 : vector<8x8xi32>
    %36 = tpu.iota {dimensions = array<i32: 1>} : vector<8x8xi32>
    %37 = arith.cmpi sle, %36, %35 : vector<8x8xi32>
    %cst_14 = arith.constant 0.000000e+00 : f32
    %cst_15 = arith.constant -1.000000e+30 : f32
    %38 = vector.broadcast %cst_14 : f32 to vector<8x8xf32>
    %39 = vector.broadcast %cst_15 : f32 to vector<8x8xf32>
    %40 = arith.select %37, %38, %39 : vector<8x8xi1>, vector<8x8xf32>
    %41 = vector.extract_strided_slice %31 {offsets = [0, 0], sizes = [8, 8], strides = [1, 1]} : vector<8x32xf32> to vector<8x8xf32>
    %42 = arith.truncf %41 : vector<8x8xf32> to vector<8x8xbf16>
    %c0_16 = arith.constant 0 : index
    %c0_17 = arith.constant 0 : index
    %43 = vector.load %arg18[%c0_16, %c0_17] : memref<8x32xbf16, #tpu.memory_space<vmem>>, vector<8x8xbf16>
    %c0_18 = arith.constant 0 : index
    %c0_19 = arith.constant 0 : index
    %44 = vector.load %arg19[%c0_18, %c0_19] : memref<8x32xbf16, #tpu.memory_space<vmem>>, vector<8x8xbf16>
    "tpu.trace_start"() <{level = 10 : i32, message = "qd,kd->qk"}> : () -> ()
    %cst_20 = arith.constant dense<0.000000e+00> : vector<8x8xf32>
    %45 = tpu.matmul %42, %43, %cst_20 {dimension_numbers = #tpu.dot_dimension_numbers<[1], [1], [0], [0], [0, 0, 1, 0], [], []>} : vector<8x8xbf16>, vector<8x8xbf16>, vector<8x8xf32> -> vector<8x8xf32>
    "tpu.trace_stop"() : () -> ()
    %cst_21 = arith.constant 0.353553385 : f32
    %46 = vector.broadcast %cst_21 : f32 to vector<8x8xf32>
    %47 = arith.mulf %45, %46 : vector<8x8xf32>
    %48 = arith.addf %47, %40 : vector<8x8xf32>
    %cst_22 = arith.constant dense<0xFF800000> : vector<8xf32>
    %49 = vector.multi_reduction <maximumf>, %48, %cst_22 [1] : vector<8x8xf32> to vector<8xf32>
    %50 = vector.shape_cast %49 : vector<8xf32> to vector<8x1xf32>
    %51 = vector.broadcast %50 : vector<8x1xf32> to vector<8x8xf32>
    %52 = arith.subf %48, %51 : vector<8x8xf32>
    %53 = math.exp %52 : vector<8x8xf32>
    %cst_23 = arith.constant dense<0.000000e+00> : vector<8xf32>
    %54 = vector.multi_reduction <add>, %53, %cst_23 [1] : vector<8x8xf32> to vector<8xf32>
    %55 = vector.shape_cast %54 : vector<8xf32> to vector<8x1xf32>
    %56 = tpu.reciprocal %55 {approx = true} : vector<8x1xf32> -> vector<8x1xf32>
    %57 = vector.broadcast %56 : vector<8x1xf32> to vector<8x8xf32>
    %58 = arith.mulf %53, %57 : vector<8x8xf32>
    %59 = arith.truncf %58 : vector<8x8xf32> to vector<8x8xbf16>
    %cst_24 = arith.constant dense<0.000000e+00> : vector<8x8xf32>
    %60 = tpu.matmul %59, %44, %cst_24 {dimension_numbers = #tpu.dot_dimension_numbers<[1], [0], [0], [1], [0, 0, 1, 1], [], []>} : vector<8x8xbf16>, vector<8x8xbf16>, vector<8x8xf32> -> vector<8x8xf32>
    %61 = arith.truncf %60 : vector<8x8xf32> to vector<8x8xbf16>
    %c0_25 = arith.constant 0 : index
    %c0_26 = arith.constant 0 : index
    %62 = vector.load %arg20[%c0_25, %c0_26] : memref<8x32xbf16, #tpu.memory_space<vmem>>, vector<8x8xbf16>
    tpu.vector_store %arg20[%c0_25, %c0_26], %61 {strides = array<i32>} : memref<8x32xbf16, #tpu.memory_space<vmem>>, vector<8x8xbf16>,
    %63 = vector.extract_strided_slice %31 {offsets = [0, 8], sizes = [8, 8], strides = [1, 1]} : vector<8x32xf32> to vector<8x8xf32>
    %64 = arith.truncf %63 : vector<8x8xf32> to vector<8x8xbf16>
    %c0_27 = arith.constant 0 : index
    %c8 = arith.constant 8 : index
    %65 = vector.load %arg18[%c0_27, %c8] : memref<8x32xbf16, #tpu.memory_space<vmem>>, vector<8x8xbf16>
    %c0_28 = arith.constant 0 : index
    %c8_29 = arith.constant 8 : index
    %66 = vector.load %arg19[%c0_28, %c8_29] : memref<8x32xbf16, #tpu.memory_space<vmem>>, vector<8x8xbf16>
    "tpu.trace_start"() <{level = 10 : i32, message = "qd,kd->qk"}> : () -> ()
    %cst_30 = arith.constant dense<0.000000e+00> : vector<8x8xf32>
    %67 = tpu.matmul %64, %65, %cst_30 {dimension_numbers = #tpu.dot_dimension_numbers<[1], [1], [0], [0], [0, 0, 1, 0], [], []>} : vector<8x8xbf16>, vector<8x8xbf16>, vector<8x8xf32> -> vector<8x8xf32>
    "tpu.trace_stop"() : () -> ()
    %cst_31 = arith.constant 0.353553385 : f32
    %68 = vector.broadcast %cst_31 : f32 to vector<8x8xf32>
    %69 = arith.mulf %67, %68 : vector<8x8xf32>
    %70 = arith.addf %69, %40 : vector<8x8xf32>
    %cst_32 = arith.constant dense<0xFF800000> : vector<8xf32>
    %71 = vector.multi_reduction <maximumf>, %70, %cst_32 [1] : vector<8x8xf32> to vector<8xf32>
    %72 = vector.shape_cast %71 : vector<8xf32> to vector<8x1xf32>
    %73 = vector.broadcast %72 : vector<8x1xf32> to vector<8x8xf32>
    %74 = arith.subf %70, %73 : vector<8x8xf32>
    %75 = math.exp %74 : vector<8x8xf32>
    %cst_33 = arith.constant dense<0.000000e+00> : vector<8xf32>
    %76 = vector.multi_reduction <add>, %75, %cst_33 [1] : vector<8x8xf32> to vector<8xf32>
    %77 = vector.shape_cast %76 : vector<8xf32> to vector<8x1xf32>
    %78 = tpu.reciprocal %77 {approx = true} : vector<8x1xf32> -> vector<8x1xf32>
    %79 = vector.broadcast %78 : vector<8x1xf32> to vector<8x8xf32>
    %80 = arith.mulf %75, %79 : vector<8x8xf32>
    %81 = arith.truncf %80 : vector<8x8xf32> to vector<8x8xbf16>
    %cst_34 = arith.constant dense<0.000000e+00> : vector<8x8xf32>
    %82 = tpu.matmul %81, %66, %cst_34 {dimension_numbers = #tpu.dot_dimension_numbers<[1], [0], [0], [1], [0, 0, 1, 1], [], []>} : vector<8x8xbf16>, vector<8x8xbf16>, vector<8x8xf32> -> vector<8x8xf32>
    %83 = arith.truncf %82 : vector<8x8xf32> to vector<8x8xbf16>
    %c0_35 = arith.constant 0 : index
    %c8_36 = arith.constant 8 : index
    %84 = vector.load %arg20[%c0_35, %c8_36] : memref<8x32xbf16, #tpu.memory_space<vmem>>, vector<8x8xbf16>
    tpu.vector_store %arg20[%c0_35, %c8_36], %83 {strides = array<i32>} : memref<8x32xbf16, #tpu.memory_space<vmem>>, vector<8x8xbf16>,
    %85 = vector.extract_strided_slice %31 {offsets = [0, 16], sizes = [8, 8], strides = [1, 1]} : vector<8x32xf32> to vector<8x8xf32>
    %86 = arith.truncf %85 : vector<8x8xf32> to vector<8x8xbf16>
    %c0_37 = arith.constant 0 : index
    %c16 = arith.constant 16 : index
    %87 = vector.load %arg18[%c0_37, %c16] : memref<8x32xbf16, #tpu.memory_space<vmem>>, vector<8x8xbf16>
    %c0_38 = arith.constant 0 : index
    %c16_39 = arith.constant 16 : index
    %88 = vector.load %arg19[%c0_38, %c16_39] : memref<8x32xbf16, #tpu.memory_space<vmem>>, vector<8x8xbf16>
    "tpu.trace_start"() <{level = 10 : i32, message = "qd,kd->qk"}> : () -> ()
    %cst_40 = arith.constant dense<0.000000e+00> : vector<8x8xf32>
    %89 = tpu.matmul %86, %87, %cst_40 {dimension_numbers = #tpu.dot_dimension_numbers<[1], [1], [0], [0], [0, 0, 1, 0], [], []>} : vector<8x8xbf16>, vector<8x8xbf16>, vector<8x8xf32> -> vector<8x8xf32>
    "tpu.trace_stop"() : () -> ()
    %cst_41 = arith.constant 0.353553385 : f32
    %90 = vector.broadcast %cst_41 : f32 to vector<8x8xf32>
    %91 = arith.mulf %89, %90 : vector<8x8xf32>
    %92 = arith.addf %91, %40 : vector<8x8xf32>
    %cst_42 = arith.constant dense<0xFF800000> : vector<8xf32>
    %93 = vector.multi_reduction <maximumf>, %92, %cst_42 [1] : vector<8x8xf32> to vector<8xf32>
    %94 = vector.shape_cast %93 : vector<8xf32> to vector<8x1xf32>
    %95 = vector.broadcast %94 : vector<8x1xf32> to vector<8x8xf32>
    %96 = arith.subf %92, %95 : vector<8x8xf32>
    %97 = math.exp %96 : vector<8x8xf32>
    %cst_43 = arith.constant dense<0.000000e+00> : vector<8xf32>
    %98 = vector.multi_reduction <add>, %97, %cst_43 [1] : vector<8x8xf32> to vector<8xf32>
    %99 = vector.shape_cast %98 : vector<8xf32> to vector<8x1xf32>
    %100 = tpu.reciprocal %99 {approx = true} : vector<8x1xf32> -> vector<8x1xf32>
    %101 = vector.broadcast %100 : vector<8x1xf32> to vector<8x8xf32>
    %102 = arith.mulf %97, %101 : vector<8x8xf32>
    %103 = arith.truncf %102 : vector<8x8xf32> to vector<8x8xbf16>
    %cst_44 = arith.constant dense<0.000000e+00> : vector<8x8xf32>
    %104 = tpu.matmul %103, %88, %cst_44 {dimension_numbers = #tpu.dot_dimension_numbers<[1], [0], [0], [1], [0, 0, 1, 1], [], []>} : vector<8x8xbf16>, vector<8x8xbf16>, vector<8x8xf32> -> vector<8x8xf32>
    %105 = arith.truncf %104 : vector<8x8xf32> to vector<8x8xbf16>
    %c0_45 = arith.constant 0 : index
    %c16_46 = arith.constant 16 : index
    %106 = vector.load %arg20[%c0_45, %c16_46] : memref<8x32xbf16, #tpu.memory_space<vmem>>, vector<8x8xbf16>
    tpu.vector_store %arg20[%c0_45, %c16_46], %105 {strides = array<i32>} : memref<8x32xbf16, #tpu.memory_space<vmem>>, vector<8x8xbf16>,
    %107 = vector.extract_strided_slice %31 {offsets = [0, 24], sizes = [8, 8], strides = [1, 1]} : vector<8x32xf32> to vector<8x8xf32>
    %108 = arith.truncf %107 : vector<8x8xf32> to vector<8x8xbf16>
    %c0_47 = arith.constant 0 : index
    %c24 = arith.constant 24 : index
    %109 = vector.load %arg18[%c0_47, %c24] : memref<8x32xbf16, #tpu.memory_space<vmem>>, vector<8x8xbf16>
    %c0_48 = arith.constant 0 : index
    %c24_49 = arith.constant 24 : index
    %110 = vector.load %arg19[%c0_48, %c24_49] : memref<8x32xbf16, #tpu.memory_space<vmem>>, vector<8x8xbf16>
    "tpu.trace_start"() <{level = 10 : i32, message = "qd,kd->qk"}> : () -> ()
    %cst_50 = arith.constant dense<0.000000e+00> : vector<8x8xf32>
    %111 = tpu.matmul %108, %109, %cst_50 {dimension_numbers = #tpu.dot_dimension_numbers<[1], [1], [0], [0], [0, 0, 1, 0], [], []>} : vector<8x8xbf16>, vector<8x8xbf16>, vector<8x8xf32> -> vector<8x8xf32>
    "tpu.trace_stop"() : () -> ()
    %cst_51 = arith.constant 0.353553385 : f32
    %112 = vector.broadcast %cst_51 : f32 to vector<8x8xf32>
    %113 = arith.mulf %111, %112 : vector<8x8xf32>
    %114 = arith.addf %113, %40 : vector<8x8xf32>
    %cst_52 = arith.constant dense<0xFF800000> : vector<8xf32>
    %115 = vector.multi_reduction <maximumf>, %114, %cst_52 [1] : vector<8x8xf32> to vector<8xf32>
    %116 = vector.shape_cast %115 : vector<8xf32> to vector<8x1xf32>
    %117 = vector.broadcast %116 : vector<8x1xf32> to vector<8x8xf32>
    %118 = arith.subf %114, %117 : vector<8x8xf32>
    %119 = math.exp %118 : vector<8x8xf32>
    %cst_53 = arith.constant dense<0.000000e+00> : vector<8xf32>
    %120 = vector.multi_reduction <add>, %119, %cst_53 [1] : vector<8x8xf32> to vector<8xf32>
    %121 = vector.shape_cast %120 : vector<8xf32> to vector<8x1xf32>
    %122 = tpu.reciprocal %121 {approx = true} : vector<8x1xf32> -> vector<8x1xf32>
    %123 = vector.broadcast %122 : vector<8x1xf32> to vector<8x8xf32>
    %124 = arith.mulf %119, %123 : vector<8x8xf32>
    %125 = arith.truncf %124 : vector<8x8xf32> to vector<8x8xbf16>
    %cst_54 = arith.constant dense<0.000000e+00> : vector<8x8xf32>
    %126 = tpu.matmul %125, %110, %cst_54 {dimension_numbers = #tpu.dot_dimension_numbers<[1], [0], [0], [1], [0, 0, 1, 1], [], []>} : vector<8x8xbf16>, vector<8x8xbf16>, vector<8x8xf32> -> vector<8x8xf32>
    %127 = arith.truncf %126 : vector<8x8xf32> to vector<8x8xbf16>
    %c0_55 = arith.constant 0 : index
    %c24_56 = arith.constant 24 : index
    %128 = vector.load %arg20[%c0_55, %c24_56] : memref<8x32xbf16, #tpu.memory_space<vmem>>, vector<8x8xbf16>
    tpu.vector_store %arg20[%c0_55, %c24_56], %127 {strides = array<i32>} : memref<8x32xbf16, #tpu.memory_space<vmem>>, vector<8x8xbf16>,
    %c0_57 = arith.constant 0 : index
    %c0_58 = arith.constant 0 : index
    %129 = vector.load %arg20[%c0_57, %c0_58] : memref<8x32xbf16, #tpu.memory_space<vmem>>, vector<8x32xbf16>
    %c0_59 = arith.constant 0 : index
    %c0_60 = arith.constant 0 : index
    %130 = vector.load %arg9[%c0_59, %c0_60] : memref<32x32xbf16, #tpu.memory_space<vmem>>, vector<32x32xbf16>
    %cst_61 = arith.constant dense<0.000000e+00> : vector<8x32xf32>
    %131 = tpu.matmul %129, %130, %cst_61 {dimension_numbers = #tpu.dot_dimension_numbers<[1], [0], [0], [1], [0, 0, 1, 1], [], []>} : vector<8x32xbf16>, vector<32x32xbf16>, vector<8x32xf32> -> vector<8x32xf32>
    %c0_62 = arith.constant 0 : index
    %c0_63 = arith.constant 0 : index
    %132 = vector.load %arg10[%c0_62, %c0_63] : memref<1x32xf32, #tpu.memory_space<vmem>>, vector<1x32xf32>
    %133 = vector.broadcast %132 : vector<1x32xf32> to vector<8x32xf32>
    %134 = arith.addf %131, %133 : vector<8x32xf32>
    %135 = arith.addf %4, %134 : vector<8x32xf32>
    %c0_64 = arith.constant 0 : index
    %c0_65 = arith.constant 0 : index
    %136 = vector.load %arg11[%c0_64, %c0_65] : memref<1x32xf32, #tpu.memory_space<vmem>>, vector<1x32xf32>
    %c0_66 = arith.constant 0 : index
    %c0_67 = arith.constant 0 : index
    %137 = vector.load %arg12[%c0_66, %c0_67] : memref<1x32xf32, #tpu.memory_space<vmem>>, vector<1x32xf32>
    %cst_68 = arith.constant dense<0.000000e+00> : vector<8xf32>
    %138 = vector.multi_reduction <add>, %135, %cst_68 [1] : vector<8x32xf32> to vector<8xf32>
    %139 = vector.shape_cast %138 : vector<8xf32> to vector<8x1xf32>
    %cst_69 = arith.constant 3.200000e+01 : f32
    %140 = vector.broadcast %cst_69 : f32 to vector<8x1xf32>
    %141 = arith.divf %139, %140 : vector<8x1xf32>
    %142 = vector.broadcast %141 : vector<8x1xf32> to vector<8x32xf32>
    %143 = arith.subf %135, %142 : vector<8x32xf32>
    %144 = arith.mulf %143, %143 : vector<8x32xf32>
    %cst_70 = arith.constant dense<0.000000e+00> : vector<8xf32>
    %145 = vector.multi_reduction <add>, %144, %cst_70 [1] : vector<8x32xf32> to vector<8xf32>
    %146 = vector.shape_cast %145 : vector<8xf32> to vector<8x1xf32>
    %cst_71 = arith.constant 3.200000e+01 : f32
    %147 = vector.broadcast %cst_71 : f32 to vector<8x1xf32>
    %148 = arith.divf %146, %147 : vector<8x1xf32>
    %149 = vector.broadcast %141 : vector<8x1xf32> to vector<8x32xf32>
    %150 = arith.subf %135, %149 : vector<8x32xf32>
    %cst_72 = arith.constant 9.99999974E-6 : f32
    %151 = vector.broadcast %cst_72 : f32 to vector<8x1xf32>
    %152 = arith.addf %148, %151 : vector<8x1xf32>
    %153 = math.rsqrt %152 : vector<8x1xf32>
    %154 = vector.broadcast %153 : vector<8x1xf32> to vector<8x32xf32>
    %155 = arith.mulf %150, %154 : vector<8x32xf32>
    %156 = vector.broadcast %136 : vector<1x32xf32> to vector<8x32xf32>
    %157 = arith.mulf %156, %155 : vector<8x32xf32>
    %158 = vector.broadcast %137 : vector<1x32xf32> to vector<8x32xf32>
    %159 = arith.addf %157, %158 : vector<8x32xf32>
    %160 = arith.truncf %159 : vector<8x32xf32> to vector<8x32xbf16>
    %c0_73 = arith.constant 0 : index
    %c0_74 = arith.constant 0 : index
    %161 = vector.load %arg13[%c0_73, %c0_74] : memref<32x128xbf16, #tpu.memory_space<vmem>>, vector<32x128xbf16>
    %cst_75 = arith.constant dense<0.000000e+00> : vector<8x128xf32>
    %162 = tpu.matmul %160, %161, %cst_75 {dimension_numbers = #tpu.dot_dimension_numbers<[1], [0], [0], [1], [0, 0, 1, 1], [], []>} : vector<8x32xbf16>, vector<32x128xbf16>, vector<8x128xf32> -> vector<8x128xf32>
    %c0_76 = arith.constant 0 : index
    %c0_77 = arith.constant 0 : index
    %163 = vector.load %arg14[%c0_76, %c0_77] : memref<1x128xf32, #tpu.memory_space<vmem>>, vector<1x128xf32>
    %164 = vector.broadcast %163 : vector<1x128xf32> to vector<8x128xf32>
    %165 = arith.addf %162, %164 : vector<8x128xf32>
    %cst_78 = arith.constant 5.000000e-01 : f32
    %166 = vector.broadcast %cst_78 : f32 to vector<8x128xf32>
    %167 = arith.mulf %166, %165 : vector<8x128xf32>
    %cst_79 = arith.constant 4.471500e-02 : f32
    %168 = vector.broadcast %cst_79 : f32 to vector<8x128xf32>
    %169 = arith.mulf %168, %165 : vector<8x128xf32>
    %170 = arith.mulf %169, %165 : vector<8x128xf32>
    %171 = arith.mulf %170, %165 : vector<8x128xf32>
    %172 = arith.addf %165, %171 : vector<8x128xf32>
    %cst_80 = arith.constant 0.797884583 : f32
    %173 = vector.broadcast %cst_80 : f32 to vector<8x128xf32>
    %174 = arith.mulf %173, %172 : vector<8x128xf32>
    %175 = math.tanh %174 : vector<8x128xf32>
    %cst_81 = arith.constant 1.000000e+00 : f32
    %176 = vector.broadcast %cst_81 : f32 to vector<8x128xf32>
    %177 = arith.addf %176, %175 : vector<8x128xf32>
    %178 = arith.mulf %167, %177 : vector<8x128xf32>
    %179 = arith.truncf %178 : vector<8x128xf32> to vector<8x128xbf16>
    %c0_82 = arith.constant 0 : index
    %c0_83 = arith.constant 0 : index
    %180 = vector.load %arg15[%c0_82, %c0_83] : memref<128x32xbf16, #tpu.memory_space<vmem>>, vector<128x32xbf16>
    %cst_84 = arith.constant dense<0.000000e+00> : vector<8x32xf32>
    %181 = tpu.matmul %179, %180, %cst_84 {dimension_numbers = #tpu.dot_dimension_numbers<[1], [0], [0], [1], [0, 0, 1, 1], [], []>} : vector<8x128xbf16>, vector<128x32xbf16>, vector<8x32xf32> -> vector<8x32xf32>
    %c0_85 = arith.constant 0 : index
    %c0_86 = arith.constant 0 : index
    %182 = vector.load %arg16[%c0_85, %c0_86] : memref<1x32xf32, #tpu.memory_space<vmem>>, vector<1x32xf32>
    %183 = vector.broadcast %182 : vector<1x32xf32> to vector<8x32xf32>
    %184 = arith.addf %181, %183 : vector<8x32xf32>
    %185 = arith.addf %135, %184 : vector<8x32xf32>
    %c0_87 = arith.constant 0 : index
    %c0_88 = arith.constant 0 : index
    %c0_89 = arith.constant 0 : index
    %186 = vector.load %arg17[%c0_87, %c0_88, %c0_89] : memref<1x8x32xf32, #tpu.memory_space<vmem>>, vector<1x8x32xf32>
    %187 = vector.shape_cast %186 : vector<1x8x32xf32> to vector<8x32xf32>
    %188 = vector.shape_cast %185 : vector<8x32xf32> to vector<1x8x32xf32>
    tpu.vector_store %arg17[%c0_87, %c0_88, %c0_89], %188 {strides = array<i32>} : memref<1x8x32xf32, #tpu.memory_space<vmem>>, vector<1x8x32xf32>,
    return
  }
  func.func @transform_0(%arg0: i32, %arg1: i32) -> (i32, i32, i32) {
    %c0_i32 = arith.constant 0 : i32
    %c0_i32_0 = arith.constant 0 : i32
    %c0_i32_1 = arith.constant 0 : i32
    return %arg0, %c0_i32, %c0_i32_0 : i32, i32, i32
  }
  func.func @transform_1(%arg0: i32, %arg1: i32) -> (i32, i32, i32) {
    %c0_i32 = arith.constant 0 : i32
    %c0_i32_0 = arith.constant 0 : i32
    return %arg0, %arg1, %c0_i32 : i32, i32, i32
  }
  func.func @transform_2(%arg0: i32, %arg1: i32) -> (i32, i32) {
    %c0_i32 = arith.constant 0 : i32
    %c0_i32_0 = arith.constant 0 : i32
    %c0_i32_1 = arith.constant 0 : i32
    return %c0_i32, %c0_i32_0 : i32, i32
  }
  func.func @transform_3(%arg0: i32, %arg1: i32) -> (i32, i32) {
    %c0_i32 = arith.constant 0 : i32
    %c0_i32_0 = arith.constant 0 : i32
    %c0_i32_1 = arith.constant 0 : i32
    return %c0_i32, %c0_i32_0 : i32, i32
  }
  func.func @transform_4(%arg0: i32, %arg1: i32) -> (i32, i32) {
    %c0_i32 = arith.constant 0 : i32
    %c0_i32_0 = arith.constant 0 : i32
    %c0_i32_1 = arith.constant 0 : i32
    return %c0_i32, %c0_i32_0 : i32, i32
  }
  func.func @transform_5(%arg0: i32, %arg1: i32) -> (i32, i32) {
    %c0_i32 = arith.constant 0 : i32
    %c0_i32_0 = arith.constant 0 : i32
    %c0_i32_1 = arith.constant 0 : i32
    return %c0_i32, %c0_i32_0 : i32, i32
  }
  func.func @transform_6(%arg0: i32, %arg1: i32) -> (i32, i32) {
    %c0_i32 = arith.constant 0 : i32
    %c0_i32_0 = arith.constant 0 : i32
    %c0_i32_1 = arith.constant 0 : i32
    return %c0_i32, %c0_i32_0 : i32, i32
  }
  func.func @transform_7(%arg0: i32, %arg1: i32) -> (i32, i32) {
    %c0_i32 = arith.constant 0 : i32
    %c0_i32_0 = arith.constant 0 : i32
    %c0_i32_1 = arith.constant 0 : i32
    return %c0_i32, %c0_i32_0 : i32, i32
  }
  func.func @transform_8(%arg0: i32, %arg1: i32) -> (i32, i32) {
    %c0_i32 = arith.constant 0 : i32
    %c0_i32_0 = arith.constant 0 : i32
    %c0_i32_1 = arith.constant 0 : i32
    return %c0_i32, %c0_i32_0 : i32, i32
  }
  func.func @transform_9(%arg0: i32, %arg1: i32) -> (i32, i32) {
    %c0_i32 = arith.constant 0 : i32
    %c0_i32_0 = arith.constant 0 : i32
    %c0_i32_1 = arith.constant 0 : i32
    return %c0_i32, %c0_i32_0 : i32, i32
  }
  func.func @transform_10(%arg0: i32, %arg1: i32) -> (i32, i32) {
    %c0_i32 = arith.constant 0 : i32
    %c0_i32_0 = arith.constant 0 : i32
    %c0_i32_1 = arith.constant 0 : i32
    return %c0_i32, %c0_i32_0 : i32, i32
  }
  func.func @transform_11(%arg0: i32, %arg1: i32) -> (i32, i32) {
    %c0_i32 = arith.constant 0 : i32
    %c0_i32_0 = arith.constant 0 : i32
    %c0_i32_1 = arith.constant 0 : i32
    return %c0_i32, %c0_i32_0 : i32, i32
  }
  func.func @transform_12(%arg0: i32, %arg1: i32) -> (i32, i32) {
    %c0_i32 = arith.constant 0 : i32
    %c0_i32_0 = arith.constant 0 : i32
    %c0_i32_1 = arith.constant 0 : i32
    return %c0_i32, %c0_i32_0 : i32, i32
  }
  func.func @transform_13(%arg0: i32, %arg1: i32) -> (i32, i32) {
    %c0_i32 = arith.constant 0 : i32
    %c0_i32_0 = arith.constant 0 : i32
    %c0_i32_1 = arith.constant 0 : i32
    return %c0_i32, %c0_i32_0 : i32, i32
  }
  func.func @transform_14(%arg0: i32, %arg1: i32) -> (i32, i32) {
    %c0_i32 = arith.constant 0 : i32
    %c0_i32_0 = arith.constant 0 : i32
    %c0_i32_1 = arith.constant 0 : i32
    return %c0_i32, %c0_i32_0 : i32, i32
  }
  func.func @transform_15(%arg0: i32, %arg1: i32) -> (i32, i32, i32) {
    %c0_i32 = arith.constant 0 : i32
    %c0_i32_0 = arith.constant 0 : i32
    return %arg0, %arg1, %c0_i32 : i32, i32, i32
  }
}

</mosaic_0001>

<llo_original>
// kernel: tpu_custom_call.1
$region0: #{tpu_custom_call.1}
  #allocation0 [shape = 'u32[]', space=smem, size = 0x4, offset = 0x4, fixed_abs, tag = 'smem constant byte address 0x4 - core index']
  #allocation1 [shape = 'u32[144,128]{1,0:T(1,128)}', space=vmem, size = 0x12000, scoped, tag = 'internal scratch']
  #allocation2 [shape = 'bf16[8,32]{1,0:T(8,128)(2,1)}', space=vmem, size = 0x800, scoped, tag = 'scratch operand']
  #allocation3 [shape = 'bf16[8,32]{1,0:T(8,128)(2,1)}', space=vmem, size = 0x800, scoped, tag = 'scratch operand']
  #allocation4 [shape = 'bf16[8,32]{1,0:T(8,128)(2,1)}', space=vmem, size = 0x800, scoped, tag = 'scratch operand']
  %s0 = inlined_call_operand.hbm [shape: f32[2,8,32], index: 0, kind: input, shape index: {}]
  %s1 = inlined_call_operand.hbm [shape: f32[2,8,32], index: 1, kind: input, shape index: {}]
  %s2 = inlined_call_operand.hbm [shape: f32[1,32], index: 2, kind: input, shape index: {}]
  %s3 = inlined_call_operand.hbm [shape: f32[1,32], index: 3, kind: input, shape index: {}]
  %s4 = inlined_call_operand.hbm [shape: bf16[32,32], index: 4, kind: input, shape index: {}]
  %s5 = inlined_call_operand.hbm [shape: bf16[32,32], index: 5, kind: input, shape index: {}]
  %s6 = inlined_call_operand.hbm [shape: bf16[32,32], index: 6, kind: input, shape index: {}]
  %s7 = inlined_call_operand.hbm [shape: bf16[32,32], index: 7, kind: input, shape index: {}]
  %s8 = inlined_call_operand.hbm [shape: f32[1,32], index: 8, kind: input, shape index: {}]
  %s9 = inlined_call_operand.hbm [shape: f32[1,32], index: 9, kind: input, shape index: {}]
  %s10 = inlined_call_operand.hbm [shape: f32[1,32], index: 10, kind: input, shape index: {}]
  %s11 = inlined_call_operand.hbm [shape: bf16[32,128], index: 11, kind: input, shape index: {}]
  %s12 = inlined_call_operand.hbm [shape: f32[1,128], index: 12, kind: input, shape index: {}]
  %s13 = inlined_call_operand.hbm [shape: bf16[128,32], index: 13, kind: input, shape index: {}]
  %s14 = inlined_call_operand.hbm [shape: f32[1,32], index: 14, kind: input, shape index: {}]
  %s15 = inlined_call_operand.hbm [shape: f32[2,8,32], index: 15, kind: output, shape index: {}]
  %s16 = sld [smem:[#allocation0]]
  $region157: #{tpu_custom_call.1} parent=0
    _
  %s18 = ssub.s32 1, %s16
  %s19 = scalar_select 0, %s18, %s16
  $region1: #{tpu_custom_call.1} parent=0
    #allocation5 [shape = 'u8[8192]{0}', space=vmem, size = 0x2000, scoped, tag = 'input window, operand 0']
    #allocation6 [shape = 's32[2]{0}', space=sflag, size = 0x8, scoped, tag = 'scoped memory for tpu_custom_call.1']
    #allocation7 [shape = 's32[2]{0}', space=sflag, size = 0x8, scoped, tag = 'scoped memory for tpu_custom_call.1']
    #allocation8 [shape = 'u8[8192]{0}', space=vmem, size = 0x2000, scoped, tag = 'input window, operand 1']
    #allocation9 [shape = 's32[2]{0}', space=sflag, size = 0x8, scoped, tag = 'scoped memory for tpu_custom_call.1']
    #allocation10 [shape = 'u8[512]{0}', space=vmem, size = 0x400, scoped, tag = 'input window, operand 2, single buffered']
    #allocation11 [shape = 'u8[512]{0}', space=vmem, size = 0x400, scoped, tag = 'input window, operand 3, single buffered']
    #allocation12 [shape = 's32[1]{0}', space=sflag, size = 0x4, scoped, tag = 'scoped memory for tpu_custom_call.1']
    #allocation13 [shape = 'u8[8192]{0}', space=vmem, size = 0x2000, scoped, tag = 'input window, operand 4, single buffered']
    #allocation14 [shape = 'u8[8192]{0}', space=vmem, size = 0x2000, scoped, tag = 'input window, operand 5, single buffered']
    #allocation15 [shape = 's32[1]{0}', space=sflag, size = 0x4, scoped, tag = 'scoped memory for tpu_custom_call.1']
    #allocation16 [shape = 'u8[8192]{0}', space=vmem, size = 0x2000, scoped, tag = 'input window, operand 6, single buffered']
    #allocation17 [shape = 'u8[8192]{0}', space=vmem, size = 0x2000, scoped, tag = 'input window, operand 7, single buffered']
    #allocation18 [shape = 's32[1]{0}', space=sflag, size = 0x4, scoped, tag = 'scoped memory for tpu_custom_call.1']
    #allocation19 [shape = 'u8[512]{0}', space=vmem, size = 0x400, scoped, tag = 'input window, operand 8, single buffered']
    #allocation20 [shape = 'u8[512]{0}', space=vmem, size = 0x400, scoped, tag = 'input window, operand 9, single buffered']
    #allocation21 [shape = 's32[1]{0}', space=sflag, size = 0x4, scoped, tag = 'scoped memory for tpu_custom_call.1']
    #allocation22 [shape = 'u8[512]{0}', space=vmem, size = 0x400, scoped, tag = 'input window, operand 10, single buffered']
    #allocation23 [shape = 'u8[8192]{0}', space=vmem, size = 0x2000, scoped, tag = 'input window, operand 11, single buffered']
    #allocation24 [shape = 's32[1]{0}', space=sflag, size = 0x4, scoped, tag = 'scoped memory for tpu_custom_call.1']
    #allocation25 [shape = 'u8[512]{0}', space=vmem, size = 0x400, scoped, tag = 'input window, operand 12, single buffered']
    #allocation26 [shape = 'u8[32768]{0}', space=vmem, size = 0x8000, scoped, tag = 'input window, operand 13, single buffered']
    #allocation27 [shape = 's32[1]{0}', space=sflag, size = 0x4, scoped, tag = 'scoped memory for tpu_custom_call.1']
    #allocation28 [shape = 'u8[512]{0}', space=vmem, size = 0x400, scoped, tag = 'input window, operand 14, single buffered']
    #allocation29 [shape = 'u8[8192]{0}', space=vmem, size = 0x2000, scoped, tag = 'output window, operand 0']
    %20 = vsyncpa [#allocation6], 0
    %s21 = scalar_lea.sflag [#allocation6], 1
    %22 = vsyncpa %s21, 0
    %23 = vsyncpa [#allocation9], 0
    %s24 = scalar_lea.sflag [#allocation9], 1
    %25 = vsyncpa %s24, 0
    %26 = vsyncpa [#allocation12], 0
    %27 = vsyncpa [#allocation15], 0
    %28 = vsyncpa [#allocation18], 0
    %29 = vsyncpa [#allocation21], 0
    %30 = vsyncpa [#allocation24], 0
    %31 = vsyncpa [#allocation27], 0
    %32 = vsyncpa [#allocation7], 0
    %s33 = scalar_lea.sflag [#allocation7], 1
    %34 = vsyncpa %s33, 0
    loop: start=0, step=1, limit=4
    $region2: #{tpu_custom_call.1} parent=1 // loop_pre_header
      _
    $region3: #{tpu_custom_call.1} parent=1 // loop_header
      %s36 = sphi 0, %s40
      %p37 = scmp.ge.s32.totalorder %s36, 4
      %s43 = sphi 0, %s55
      %s44 = sphi 0, %s51
      %s45 = sphi 0, %s43
      %s46 = sphi 0, %s44
      %s47 = sphi 0, %s45
      %s48 = sphi 0, %s46
      %s58 = sphi 0, %s60
      %s61 = sphi 0, %s58
      %s62 = sphi 0, %s61
      %s78 = sphi 0, %s62
      %s86 = sphi 0, %s88
      %s89 = sphi 0, %s86
      %s90 = sphi 0, %s89
      %s106 = sphi 0, %s90
      %s110 = sphi 0, %s110
      %s112 = sphi 0, %s110
      %s113 = sphi 0, %s112
      %s127 = sphi 0, %s113
      %s131 = sphi 0, %s131
      %s133 = sphi 0, %s131
      %s134 = sphi 0, %s133
      %s148 = sphi 0, %s134
      %s152 = sphi 0, %s152
      %s154 = sphi 0, %s152
      %s155 = sphi 0, %s154
      %s169 = sphi 0, %s155
      %s173 = sphi 0, %s173
      %s175 = sphi 0, %s173
      %s176 = sphi 0, %s175
      %s190 = sphi 0, %s176
      %s194 = sphi 0, %s194
      %s196 = sphi 0, %s194
      %s197 = sphi 0, %s196
      %s211 = sphi 0, %s197
      %s215 = sphi 0, %s215
      %s217 = sphi 0, %s215
      %s218 = sphi 0, %s217
      %s232 = sphi 0, %s218
      %s236 = sphi 0, %s236
      %s238 = sphi 0, %s236
      %s239 = sphi 0, %s238
      %s253 = sphi 0, %s239
      %s257 = sphi 0, %s257
      %s259 = sphi 0, %s257
      %s260 = sphi 0, %s259
      %s274 = sphi 0, %s260
      %s278 = sphi 0, %s278
      %s280 = sphi 0, %s278
      %s281 = sphi 0, %s280
      %s295 = sphi 0, %s281
      %s299 = sphi 0, %s299
      %s301 = sphi 0, %s299
      %s302 = sphi 0, %s301
      %s316 = sphi 0, %s302
      %s320 = sphi 0, %s320
      %s322 = sphi 0, %s320
      %s323 = sphi 0, %s322
      %s337 = sphi 0, %s323
      %s341 = sphi 0, %s341
      %s343 = sphi 0, %s341
      %s344 = sphi 0, %s343
      %s358 = sphi 0, %s344
      %s362 = sphi 0, %s362
      %s364 = sphi 0, %s362
      %s365 = sphi 0, %s364
      %s379 = sphi 0, %s365
      %s387 = sphi 0, %s389
      %s390 = sphi 0, %s387
      %s391 = sphi 0, %s390
      %s407 = sphi 0, %s391
    $region4: #{tpu_custom_call.1} parent=1 // loop_header_branch
      %39 = sbr.rel (%p37) target = $region8
    $region5: #{tpu_custom_call.1} parent=1 // loop_body
      %s41 = ssub.s32 %s36, 1
      %s42 = ssub.s32 %s36, 2
      %s49 = sadd.s32 1, %s44
      %p50 = scmp.ge.s32.totalorder %s49, 1
      %s51 = scalar_select %p50, 0, %s49
      %s52 = sadd.s32 1, %s43
      %s53 = scalar_select %p50, %s52, %s43
      %p54 = scmp.ge.s32.totalorder %s53, 2
      %s55 = scalar_select %p54, 0, %s53
      %s56 = ssub.s32 %s43, %s55
      %p57 = scmp.eq.s32.totalorder %s56, 0
      %s59 = sadd.s32 %s58, 1
      %s60 = scalar_select %p57, %s58, %s59
      %p63 = pneg %p57
      %p64 = scmp.eq.s32.totalorder %s36, 1
      %p65 = por %p63, %p64
      %p66 = scmp.ne.s32.totalorder %s58, %s61
      %p67 = scmp.eq.s32.totalorder %s36, 0
      %p68 = por %p66, %p67
      %p69 = scmp.ne.s32.totalorder %s58, %s61
      %p70 = scmp.eq.s32.totalorder %s41, 1
      %p71 = por %p69, %p70
      %p72 = scmp.ne.s32.totalorder %s61, %s62
      %p73 = scmp.eq.s32.totalorder %s41, 0
      %p74 = por %p72, %p73
      %p75 = scmp.ne.s32.totalorder %s61, %s62
      %p76 = scmp.eq.s32.totalorder %s42, 1
      %p77 = por %p75, %p76
      %p79 = scmp.ne.s32.totalorder %s62, %s78
      %p80 = scmp.eq.s32.totalorder %s42, 0
      %p81 = por %p79, %p80
      %s82 = ssub.s32 %s43, %s55
      %s83 = ssub.s32 %s44, %s51
      %s84 = sor.u32 %s82, %s83
      %p85 = scmp.eq.s32.totalorder %s84, 0
      %s87 = sadd.s32 %s86, 1
      %s88 = scalar_select %p85, %s86, %s87
      %p91 = pneg %p85
      %p92 = scmp.eq.s32.totalorder %s36, 1
      %p93 = por %p91, %p92
      %p94 = scmp.ne.s32.totalorder %s86, %s89
      %p95 = scmp.eq.s32.totalorder %s36, 0
      %p96 = por %p94, %p95
      %p97 = scmp.ne.s32.totalorder %s86, %s89
      %p98 = scmp.eq.s32.totalorder %s41, 1
      %p99 = por %p97, %p98
      %p100 = scmp.ne.s32.totalorder %s89, %s90
      %p101 = scmp.eq.s32.totalorder %s41, 0
      %p102 = por %p100, %p101
      %p103 = scmp.ne.s32.totalorder %s89, %s90
      %p104 = scmp.eq.s32.totalorder %s42, 1
      %p105 = por %p103, %p104
      %p107 = scmp.ne.s32.totalorder %s90, %s106
      %p108 = scmp.eq.s32.totalorder %s42, 0
      %p109 = por %p107, %p108
      %s111 = sadd.s32 %s110, 1
      %p114 = scmp.eq.s32.totalorder %s36, 1
      %p115 = scmp.ne.s32.totalorder %s110, %s112
      %p116 = scmp.eq.s32.totalorder %s36, 0
      %p117 = por %p115, %p116
      %p118 = scmp.ne.s32.totalorder %s110, %s112
      %p119 = scmp.eq.s32.totalorder %s41, 1
      %p120 = por %p118, %p119
      %p121 = scmp.ne.s32.totalorder %s112, %s113
      %p122 = scmp.eq.s32.totalorder %s41, 0
      %p123 = por %p121, %p122
      %p124 = scmp.ne.s32.totalorder %s112, %s113
      %p125 = scmp.eq.s32.totalorder %s42, 1
      %p126 = por %p124, %p125
      %p128 = scmp.ne.s32.totalorder %s113, %s127
      %p129 = scmp.eq.s32.totalorder %s42, 0
      %p130 = por %p128, %p129
      %s132 = sadd.s32 %s131, 1
      %p135 = scmp.eq.s32.totalorder %s36, 1
      %p136 = scmp.ne.s32.totalorder %s131, %s133
      %p137 = scmp.eq.s32.totalorder %s36, 0
      %p138 = por %p136, %p137
      %p139 = scmp.ne.s32.totalorder %s131, %s133
      %p140 = scmp.eq.s32.totalorder %s41, 1
      %p141 = por %p139, %p140
      %p142 = scmp.ne.s32.totalorder %s133, %s134
      %p143 = scmp.eq.s32.totalorder %s41, 0
      %p144 = por %p142, %p143
      %p145 = scmp.ne.s32.totalorder %s133, %s134
      %p146 = scmp.eq.s32.totalorder %s42, 1
      %p147 = por %p145, %p146
      %p149 = scmp.ne.s32.totalorder %s134, %s148
      %p150 = scmp.eq.s32.totalorder %s42, 0
      %p151 = por %p149, %p150
      %s153 = sadd.s32 %s152, 1
      %p156 = scmp.eq.s32.totalorder %s36, 1
      %p157 = scmp.ne.s32.totalorder %s152, %s154
      %p158 = scmp.eq.s32.totalorder %s36, 0
      %p159 = por %p157, %p158
      %p160 = scmp.ne.s32.totalorder %s152, %s154
      %p161 = scmp.eq.s32.totalorder %s41, 1
      %p162 = por %p160, %p161
      %p163 = scmp.ne.s32.totalorder %s154, %s155
      %p164 = scmp.eq.s32.totalorder %s41, 0
      %p165 = por %p163, %p164
      %p166 = scmp.ne.s32.totalorder %s154, %s155
      %p167 = scmp.eq.s32.totalorder %s42, 1
      %p168 = por %p166, %p167
      %p170 = scmp.ne.s32.totalorder %s155, %s169
      %p171 = scmp.eq.s32.totalorder %s42, 0
      %p172 = por %p170, %p171
      %s174 = sadd.s32 %s173, 1
      %p177 = scmp.eq.s32.totalorder %s36, 1
      %p178 = scmp.ne.s32.totalorder %s173, %s175
      %p179 = scmp.eq.s32.totalorder %s36, 0
      %p180 = por %p178, %p179
      %p181 = scmp.ne.s32.totalorder %s173, %s175
      %p182 = scmp.eq.s32.totalorder %s41, 1
      %p183 = por %p181, %p182
      %p184 = scmp.ne.s32.totalorder %s175, %s176
      %p185 = scmp.eq.s32.totalorder %s41, 0
      %p186 = por %p184, %p185
      %p187 = scmp.ne.s32.totalorder %s175, %s176
      %p188 = scmp.eq.s32.totalorder %s42, 1
      %p189 = por %p187, %p188
      %p191 = scmp.ne.s32.totalorder %s176, %s190
      %p192 = scmp.eq.s32.totalorder %s42, 0
      %p193 = por %p191, %p192
      %s195 = sadd.s32 %s194, 1
      %p198 = scmp.eq.s32.totalorder %s36, 1
      %p199 = scmp.ne.s32.totalorder %s194, %s196
      %p200 = scmp.eq.s32.totalorder %s36, 0
      %p201 = por %p199, %p200
      %p202 = scmp.ne.s32.totalorder %s194, %s196
      %p203 = scmp.eq.s32.totalorder %s41, 1
      %p204 = por %p202, %p203
      %p205 = scmp.ne.s32.totalorder %s196, %s197
      %p206 = scmp.eq.s32.totalorder %s41, 0
      %p207 = por %p205, %p206
      %p208 = scmp.ne.s32.totalorder %s196, %s197
      %p209 = scmp.eq.s32.totalorder %s42, 1
      %p210 = por %p208, %p209
      %p212 = scmp.ne.s32.totalorder %s197, %s211
      %p213 = scmp.eq.s32.totalorder %s42, 0
      %p214 = por %p212, %p213
      %s216 = sadd.s32 %s215, 1
      %p219 = scmp.eq.s32.totalorder %s36, 1
      %p220 = scmp.ne.s32.totalorder %s215, %s217
      %p221 = scmp.eq.s32.totalorder %s36, 0
      %p222 = por %p220, %p221
      %p223 = scmp.ne.s32.totalorder %s215, %s217
      %p224 = scmp.eq.s32.totalorder %s41, 1
      %p225 = por %p223, %p224
      %p226 = scmp.ne.s32.totalorder %s217, %s218
      %p227 = scmp.eq.s32.totalorder %s41, 0
      %p228 = por %p226, %p227
      %p229 = scmp.ne.s32.totalorder %s217, %s218
      %p230 = scmp.eq.s32.totalorder %s42, 1
      %p231 = por %p229, %p230
      %p233 = scmp.ne.s32.totalorder %s218, %s232
      %p234 = scmp.eq.s32.totalorder %s42, 0
      %p235 = por %p233, %p234
      %s237 = sadd.s32 %s236, 1
      %p240 = scmp.eq.s32.totalorder %s36, 1
      %p241 = scmp.ne.s32.totalorder %s236, %s238
      %p242 = scmp.eq.s32.totalorder %s36, 0
      %p243 = por %p241, %p242
      %p244 = scmp.ne.s32.totalorder %s236, %s238
      %p245 = scmp.eq.s32.totalorder %s41, 1
      %p246 = por %p244, %p245
      %p247 = scmp.ne.s32.totalorder %s238, %s239
      %p248 = scmp.eq.s32.totalorder %s41, 0
      %p249 = por %p247, %p248
      %p250 = scmp.ne.s32.totalorder %s238, %s239
      %p251 = scmp.eq.s32.totalorder %s42, 1
      %p252 = por %p250, %p251
      %p254 = scmp.ne.s32.totalorder %s239, %s253
      %p255 = scmp.eq.s32.totalorder %s42, 0
      %p256 = por %p254, %p255
      %s258 = sadd.s32 %s257, 1
      %p261 = scmp.eq.s32.totalorder %s36, 1
      %p262 = scmp.ne.s32.totalorder %s257, %s259
      %p263 = scmp.eq.s32.totalorder %s36, 0
      %p264 = por %p262, %p263
      %p265 = scmp.ne.s32.totalorder %s257, %s259
      %p266 = scmp.eq.s32.totalorder %s41, 1
      %p267 = por %p265, %p266
      %p268 = scmp.ne.s32.totalorder %s259, %s260
      %p269 = scmp.eq.s32.totalorder %s41, 0
      %p270 = por %p268, %p269
      %p271 = scmp.ne.s32.totalorder %s259, %s260
      %p272 = scmp.eq.s32.totalorder %s42, 1
      %p273 = por %p271, %p272
      %p275 = scmp.ne.s32.totalorder %s260, %s274
      %p276 = scmp.eq.s32.totalorder %s42, 0
      %p277 = por %p275, %p276
      %s279 = sadd.s32 %s278, 1
      %p282 = scmp.eq.s32.totalorder %s36, 1
      %p283 = scmp.ne.s32.totalorder %s278, %s280
      %p284 = scmp.eq.s32.totalorder %s36, 0
      %p285 = por %p283, %p284
      %p286 = scmp.ne.s32.totalorder %s278, %s280
      %p287 = scmp.eq.s32.totalorder %s41, 1
      %p288 = por %p286, %p287
      %p289 = scmp.ne.s32.totalorder %s280, %s281
      %p290 = scmp.eq.s32.totalorder %s41, 0
      %p291 = por %p289, %p290
      %p292 = scmp.ne.s32.totalorder %s280, %s281
      %p293 = scmp.eq.s32.totalorder %s42, 1
      %p294 = por %p292, %p293
      %p296 = scmp.ne.s32.totalorder %s281, %s295
      %p297 = scmp.eq.s32.totalorder %s42, 0
      %p298 = por %p296, %p297
      %s300 = sadd.s32 %s299, 1
      %p303 = scmp.eq.s32.totalorder %s36, 1
      %p304 = scmp.ne.s32.totalorder %s299, %s301
      %p305 = scmp.eq.s32.totalorder %s36, 0
      %p306 = por %p304, %p305
      %p307 = scmp.ne.s32.totalorder %s299, %s301
      %p308 = scmp.eq.s32.totalorder %s41, 1
      %p309 = por %p307, %p308
      %p310 = scmp.ne.s32.totalorder %s301, %s302
      %p311 = scmp.eq.s32.totalorder %s41, 0
      %p312 = por %p310, %p311
      %p313 = scmp.ne.s32.totalorder %s301, %s302
      %p314 = scmp.eq.s32.totalorder %s42, 1
      %p315 = por %p313, %p314
      %p317 = scmp.ne.s32.totalorder %s302, %s316
      %p318 = scmp.eq.s32.totalorder %s42, 0
      %p319 = por %p317, %p318
      %s321 = sadd.s32 %s320, 1
      %p324 = scmp.eq.s32.totalorder %s36, 1
      %p325 = scmp.ne.s32.totalorder %s320, %s322
      %p326 = scmp.eq.s32.totalorder %s36, 0
      %p327 = por %p325, %p326
      %p328 = scmp.ne.s32.totalorder %s320, %s322
      %p329 = scmp.eq.s32.totalorder %s41, 1
      %p330 = por %p328, %p329
      %p331 = scmp.ne.s32.totalorder %s322, %s323
      %p332 = scmp.eq.s32.totalorder %s41, 0
      %p333 = por %p331, %p332
      %p334 = scmp.ne.s32.totalorder %s322, %s323
      %p335 = scmp.eq.s32.totalorder %s42, 1
      %p336 = por %p334, %p335
      %p338 = scmp.ne.s32.totalorder %s323, %s337
      %p339 = scmp.eq.s32.totalorder %s42, 0
      %p340 = por %p338, %p339
      %s342 = sadd.s32 %s341, 1
      %p345 = scmp.eq.s32.totalorder %s36, 1
      %p346 = scmp.ne.s32.totalorder %s341, %s343
      %p347 = scmp.eq.s32.totalorder %s36, 0
      %p348 = por %p346, %p347
      %p349 = scmp.ne.s32.totalorder %s341, %s343
      %p350 = scmp.eq.s32.totalorder %s41, 1
      %p351 = por %p349, %p350
      %p352 = scmp.ne.s32.totalorder %s343, %s344
      %p353 = scmp.eq.s32.totalorder %s41, 0
      %p354 = por %p352, %p353
      %p355 = scmp.ne.s32.totalorder %s343, %s344
      %p356 = scmp.eq.s32.totalorder %s42, 1
      %p357 = por %p355, %p356
      %p359 = scmp.ne.s32.totalorder %s344, %s358
      %p360 = scmp.eq.s32.totalorder %s42, 0
      %p361 = por %p359, %p360
      %s363 = sadd.s32 %s362, 1
      %p366 = scmp.eq.s32.totalorder %s36, 1
      %p367 = scmp.ne.s32.totalorder %s362, %s364
      %p368 = scmp.eq.s32.totalorder %s36, 0
      %p369 = por %p367, %p368
      %p370 = scmp.ne.s32.totalorder %s362, %s364
      %p371 = scmp.eq.s32.totalorder %s41, 1
      %p372 = por %p370, %p371
      %p373 = scmp.ne.s32.totalorder %s364, %s365
      %p374 = scmp.eq.s32.totalorder %s41, 0
      %p375 = por %p373, %p374
      %p376 = scmp.ne.s32.totalorder %s364, %s365
      %p377 = scmp.eq.s32.totalorder %s42, 1
      %p378 = por %p376, %p377
      %p380 = scmp.ne.s32.totalorder %s365, %s379
      %p381 = scmp.eq.s32.totalorder %s42, 0
      %p382 = por %p380, %p381
      %s383 = ssub.s32 %s43, %s55
      %s384 = ssub.s32 %s44, %s51
      %s385 = sor.u32 %s383, %s384
      %p386 = scmp.eq.s32.totalorder %s385, 0
      %s388 = sadd.s32 %s387, 1
      %s389 = scalar_select %p386, %s387, %s388
      %p392 = pneg %p386
      %p393 = scmp.eq.s32.totalorder %s36, 1
      %p394 = por %p392, %p393
      %p395 = scmp.ne.s32.totalorder %s387, %s390
      %p396 = scmp.eq.s32.totalorder %s36, 0
      %p397 = por %p395, %p396
      %p398 = scmp.ne.s32.totalorder %s387, %s390
      %p399 = scmp.eq.s32.totalorder %s41, 1
      %p400 = por %p398, %p399
      %p401 = scmp.ne.s32.totalorder %s390, %s391
      %p402 = scmp.eq.s32.totalorder %s41, 0
      %p403 = por %p401, %p402
      %p404 = scmp.ne.s32.totalorder %s390, %s391
      %p405 = scmp.eq.s32.totalorder %s42, 1
      %p406 = por %p404, %p405
      %p408 = scmp.ne.s32.totalorder %s391, %s407
      %p409 = scmp.eq.s32.totalorder %s42, 0
      %p410 = por %p408, %p409
      %p411 = scmp.le.s32.totalorder 1, %s36
      %p412 = scmp.lt.s32.totalorder %s36, 3
      %p413 = pnand %p411, %p412
      %p414 = pneg %p413
      // Predicated region
      $region9: #{tpu_custom_call.1} parent=5 // pred_check
        _
      $region10: #{tpu_custom_call.1} parent=5 // pred_check_branch
        %416 = sbr.rel (%p413) target = $region12
      $region11: #{tpu_custom_call.1} parent=5 // pred_region
        %s417 = ssub.s32 %s36, 1
        // Predicated region
        $region13: #{tpu_custom_call.1} parent=11 // pred_check
          %p418 = pneg %p123
        $region14: #{tpu_custom_call.1} parent=11 // pred_check_branch
          %420 = sbr.rel (%p418) target = $region16
        $region15: #{tpu_custom_call.1} parent=11 // pred_region
          %s422 = ssub.s32 16, 16
          %423 = vsyncadd [#allocation9], %s422
          %s425 = sshll.u32 [#allocation10], 4
          %s426 = int_to_ptr.vmem [resolvable:$true] %s425
          %428 = dma.hbm_to_vmem [thread:$0]  %s2, 16, %s426, [#allocation9]
        $region16: #{tpu_custom_call.1} parent=11 // pred_fallthru
          _
        // Predicated region
        $region17: #{tpu_custom_call.1} parent=11 // pred_check
          %p429 = pneg %p144
        $region18: #{tpu_custom_call.1} parent=11 // pred_check_branch
          %431 = sbr.rel (%p429) target = $region20
        $region19: #{tpu_custom_call.1} parent=11 // pred_region
          %s433 = ssub.s32 16, 16
          %434 = vsyncadd [#allocation12], %s433
          %s436 = sshll.u32 [#allocation11], 4
          %s437 = int_to_ptr.vmem [resolvable:$true] %s436
          %439 = dma.hbm_to_vmem [thread:$0]  %s3, 16, %s437, [#allocation12]
        $region20: #{tpu_custom_call.1} parent=11 // pred_fallthru
          _
        // Predicated region
        $region21: #{tpu_custom_call.1} parent=11 // pred_check
          %p440 = pneg %p165
        $region22: #{tpu_custom_call.1} parent=11 // pred_check_branch
          %442 = sbr.rel (%p440) target = $region24
        $region23: #{tpu_custom_call.1} parent=11 // pred_region
          %s444 = ssub.s32 256, 256
          %445 = vsyncadd [#allocation12], %s444
          %s446 = sshll.u32 [#allocation13], 4
          %s447 = int_to_ptr.vmem [resolvable:$true] %s446
          %452 = dma.hbm_to_vmem [thread:$0]  %s4, 256, %s447, [#allocation12], 64, 64, 4
        $region24: #{tpu_custom_call.1} parent=11 // pred_fallthru
          _
        // Predicated region
        $region25: #{tpu_custom_call.1} parent=11 // pred_check
          %p453 = pneg %p186
        $region26: #{tpu_custom_call.1} parent=11 // pred_check_branch
          %455 = sbr.rel (%p453) target = $region28
        $region27: #{tpu_custom_call.1} parent=11 // pred_region
          %s457 = ssub.s32 256, 256
          %458 = vsyncadd [#allocation15], %s457
          %s459 = sshll.u32 [#allocation14], 4
          %s460 = int_to_ptr.vmem [resolvable:$true] %s459
          %465 = dma.hbm_to_vmem [thread:$0]  %s5, 256, %s460, [#allocation15], 64, 64, 4
        $region28: #{tpu_custom_call.1} parent=11 // pred_fallthru
          _
        // Predicated region
        $region29: #{tpu_custom_call.1} parent=11 // pred_check
          %p466 = pneg %p207
        $region30: #{tpu_custom_call.1} parent=11 // pred_check_branch
          %468 = sbr.rel (%p466) target = $region32
        $region31: #{tpu_custom_call.1} parent=11 // pred_region
          %s470 = ssub.s32 256, 256
          %471 = vsyncadd [#allocation15], %s470
          %s472 = sshll.u32 [#allocation16], 4
          %s473 = int_to_ptr.vmem [resolvable:$true] %s472
          %478 = dma.hbm_to_vmem [thread:$0]  %s6, 256, %s473, [#allocation15], 64, 64, 4
        $region32: #{tpu_custom_call.1} parent=11 // pred_fallthru
          _
        // Predicated region
        $region33: #{tpu_custom_call.1} parent=11 // pred_check
          %p479 = pneg %p228
        $region34: #{tpu_custom_call.1} parent=11 // pred_check_branch
          %481 = sbr.rel (%p479) target = $region36
        $region35: #{tpu_custom_call.1} parent=11 // pred_region
          %s483 = ssub.s32 256, 256
          %484 = vsyncadd [#allocation18], %s483
          %s485 = sshll.u32 [#allocation17], 4
          %s486 = int_to_ptr.vmem [resolvable:$true] %s485
          %491 = dma.hbm_to_vmem [thread:$0]  %s7, 256, %s486, [#allocation18], 64, 64, 4
        $region36: #{tpu_custom_call.1} parent=11 // pred_fallthru
          _
        // Predicated region
        $region37: #{tpu_custom_call.1} parent=11 // pred_check
          %p492 = pneg %p249
        $region38: #{tpu_custom_call.1} parent=11 // pred_check_branch
          %494 = sbr.rel (%p492) target = $region40
        $region39: #{tpu_custom_call.1} parent=11 // pred_region
          %s496 = ssub.s32 16, 16
          %497 = vsyncadd [#allocation18], %s496
          %s499 = sshll.u32 [#allocation19], 4
          %s500 = int_to_ptr.vmem [resolvable:$true] %s499
          %502 = dma.hbm_to_vmem [thread:$0]  %s8, 16, %s500, [#allocation18]
        $region40: #{tpu_custom_call.1} parent=11 // pred_fallthru
          _
        // Predicated region
        $region41: #{tpu_custom_call.1} parent=11 // pred_check
          %p503 = pneg %p270
        $region42: #{tpu_custom_call.1} parent=11 // pred_check_branch
          %505 = sbr.rel (%p503) target = $region44
        $region43: #{tpu_custom_call.1} parent=11 // pred_region
          %s507 = ssub.s32 16, 16
          %508 = vsyncadd [#allocation21], %s507
          %s510 = sshll.u32 [#allocation20], 4
          %s511 = int_to_ptr.vmem [resolvable:$true] %s510
          %513 = dma.hbm_to_vmem [thread:$0]  %s9, 16, %s511, [#allocation21]
        $region44: #{tpu_custom_call.1} parent=11 // pred_fallthru
          _
        // Predicated region
        $region45: #{tpu_custom_call.1} parent=11 // pred_check
          %p514 = pneg %p291
        $region46: #{tpu_custom_call.1} parent=11 // pred_check_branch
          %516 = sbr.rel (%p514) target = $region48
        $region47: #{tpu_custom_call.1} parent=11 // pred_region
          %s518 = ssub.s32 16, 16
          %519 = vsyncadd [#allocation21], %s518
          %s521 = sshll.u32 [#allocation22], 4
          %s522 = int_to_ptr.vmem [resolvable:$true] %s521
          %524 = dma.hbm_to_vmem [thread:$0]  %s10, 16, %s522, [#allocation21]
        $region48: #{tpu_custom_call.1} parent=11 // pred_fallthru
          _
        // Predicated region
        $region49: #{tpu_custom_call.1} parent=11 // pred_check
          %p525 = pneg %p312
        $region50: #{tpu_custom_call.1} parent=11 // pred_check_branch
          %527 = sbr.rel (%p525) target = $region52
        $region51: #{tpu_custom_call.1} parent=11 // pred_region
          %s529 = ssub.s32 256, 256
          %530 = vsyncadd [#allocation24], %s529
          %s531 = sshll.u32 [#allocation23], 4
          %s532 = int_to_ptr.vmem [resolvable:$true] %s531
          %537 = dma.hbm_to_vmem [thread:$0]  %s11, 256, %s532, [#allocation24], 64, 64, 4
        $region52: #{tpu_custom_call.1} parent=11 // pred_fallthru
          _
        // Predicated region
        $region53: #{tpu_custom_call.1} parent=11 // pred_check
          %p538 = pneg %p333
        $region54: #{tpu_custom_call.1} parent=11 // pred_check_branch
          %540 = sbr.rel (%p538) target = $region56
        $region55: #{tpu_custom_call.1} parent=11 // pred_region
          %s542 = ssub.s32 16, 16
          %543 = vsyncadd [#allocation24], %s542
          %s545 = sshll.u32 [#allocation25], 4
          %s546 = int_to_ptr.vmem [resolvable:$true] %s545
          %548 = dma.hbm_to_vmem [thread:$0]  %s12, 16, %s546, [#allocation24]
        $region56: #{tpu_custom_call.1} parent=11 // pred_fallthru
          _
        // Predicated region
        $region57: #{tpu_custom_call.1} parent=11 // pred_check
          %p549 = pneg %p354
        $region58: #{tpu_custom_call.1} parent=11 // pred_check_branch
          %551 = sbr.rel (%p549) target = $region60
        $region59: #{tpu_custom_call.1} parent=11 // pred_region
          %s553 = ssub.s32 1024, 1024
          %554 = vsyncadd [#allocation27], %s553
          %s555 = sshll.u32 [#allocation26], 4
          %s556 = int_to_ptr.vmem [resolvable:$true] %s555
          %561 = dma.hbm_to_vmem [thread:$0]  %s13, 1024, %s556, [#allocation27], 64, 64, 4
        $region60: #{tpu_custom_call.1} parent=11 // pred_fallthru
          _
        // Predicated region
        $region61: #{tpu_custom_call.1} parent=11 // pred_check
          %p562 = pneg %p375
        $region62: #{tpu_custom_call.1} parent=11 // pred_check_branch
          %564 = sbr.rel (%p562) target = $region64
        $region63: #{tpu_custom_call.1} parent=11 // pred_region
          %s566 = ssub.s32 16, 16
          %567 = vsyncadd [#allocation27], %s566
          %s569 = sshll.u32 [#allocation28], 4
          %s570 = int_to_ptr.vmem [resolvable:$true] %s569
          %572 = dma.hbm_to_vmem [thread:$0]  %s14, 16, %s570, [#allocation27]
        $region64: #{tpu_custom_call.1} parent=11 // pred_fallthru
          _
      $region12: #{tpu_custom_call.1} parent=5 // pred_fallthru
        _
      %p573 = scmp.lt.s32.totalorder %s36, 2
      // Predicated region
      $region65: #{tpu_custom_call.1} parent=5 // pred_check
        %p574 = pneg %p573
      $region66: #{tpu_custom_call.1} parent=5 // pred_check_branch
        %576 = sbr.rel (%p574) target = $region68
      $region67: #{tpu_custom_call.1} parent=5 // pred_region
        // Predicated region
        $region69: #{tpu_custom_call.1} parent=67 // pred_check
          %p577 = pneg %p68
        $region70: #{tpu_custom_call.1} parent=67 // pred_check_branch
          %579 = sbr.rel (%p577) target = $region72
        $region71: #{tpu_custom_call.1} parent=67 // pred_region
          %s580 = sand.u32 %s58, 1
          %s581 = scalar_lea.sflag [#allocation6], %s580
          %s582 = sand.u32 %s58, 1
          %s583 = smul.addr %s582, 8
          %s584 = scalar_lea.vmem [#allocation5], %s583
          %s586 = ssub.s32 128, 128
          %587 = vsyncadd %s581, %s586
          %s588 = smul.addr %s43, 128
          %s589 = scalar_lea.hbm %s0, %s588
          %s591 = sshll.u32 %s584, 4
          %s592 = int_to_ptr.vmem [resolvable:$true] %s591
          %594 = dma.hbm_to_vmem [thread:$0]  %s589, 128, %s592, %s581
        $region72: #{tpu_custom_call.1} parent=67 // pred_fallthru
          _
        // Predicated region
        $region73: #{tpu_custom_call.1} parent=67 // pred_check
          %p595 = pneg %p96
        $region74: #{tpu_custom_call.1} parent=67 // pred_check_branch
          %597 = sbr.rel (%p595) target = $region76
        $region75: #{tpu_custom_call.1} parent=67 // pred_region
          %s598 = sand.u32 %s36, 1
          %s599 = scalar_lea.sflag [#allocation9], %s598
          %s600 = sand.u32 %s86, 1
          %s601 = smul.addr %s600, 8
          %s602 = scalar_lea.vmem [#allocation8], %s601
          %s604 = ssub.s32 128, 128
          %605 = vsyncadd %s599, %s604
          %s606 = sadd.s32 %s44, %s43
          %s607 = smul.addr %s606, 128
          %s608 = scalar_lea.hbm %s1, %s607
          %s610 = sshll.u32 %s602, 4
          %s611 = int_to_ptr.vmem [resolvable:$true] %s610
          %613 = dma.hbm_to_vmem [thread:$0]  %s608, 128, %s611, %s599
        $region76: #{tpu_custom_call.1} parent=67 // pred_fallthru
          _
      $region68: #{tpu_custom_call.1} parent=5 // pred_fallthru
        _
      %p614 = scmp.le.s32.totalorder 1, %s36
      %p615 = scmp.lt.s32.totalorder %s36, 3
      %p616 = pnand %p614, %p615
      %p617 = pneg %p616
      // Predicated region
      $region77: #{tpu_custom_call.1} parent=5 // pred_check
        _
      $region78: #{tpu_custom_call.1} parent=5 // pred_check_branch
        %619 = sbr.rel (%p616) target = $region80
      $region79: #{tpu_custom_call.1} parent=5 // pred_region
        %s620 = ssub.s32 %s36, 1
        %s621 = sand.u32 %s61, 1
        %s622 = scalar_lea.sflag [#allocation6], %s621
        %s623 = sand.u32 %s61, 1
        %s624 = smul.addr %s623, 8
        %s625 = scalar_lea.vmem [#allocation5], %s624
        // Predicated region
        $region81: #{tpu_custom_call.1} parent=79 // pred_check
          %p626 = pneg %p74
        $region82: #{tpu_custom_call.1} parent=79 // pred_check_branch
          %628 = sbr.rel (%p626) target = $region84
        $region83: #{tpu_custom_call.1} parent=79 // pred_region
          %629 = dma.done %s622, 128
        $region84: #{tpu_custom_call.1} parent=79 // pred_fallthru
          _
        %s630 = sand.u32 %s41, 1
        %s631 = scalar_lea.sflag [#allocation9], %s630
        %s632 = sand.u32 %s89, 1
        %s633 = smul.addr %s632, 8
        %s634 = scalar_lea.vmem [#allocation8], %s633
        // Predicated region
        $region85: #{tpu_custom_call.1} parent=79 // pred_check
          %p635 = pneg %p102
        $region86: #{tpu_custom_call.1} parent=79 // pred_check_branch
          %637 = sbr.rel (%p635) target = $region88
        $region87: #{tpu_custom_call.1} parent=79 // pred_region
          %638 = dma.done %s631, 128
        $region88: #{tpu_custom_call.1} parent=79 // pred_fallthru
          _
        // Predicated region
        $region89: #{tpu_custom_call.1} parent=79 // pred_check
          %p639 = pneg %p123
        $region90: #{tpu_custom_call.1} parent=79 // pred_check_branch
          %641 = sbr.rel (%p639) target = $region92
        $region91: #{tpu_custom_call.1} parent=79 // pred_region
          %642 = dma.done [#allocation9], 16
        $region92: #{tpu_custom_call.1} parent=79 // pred_fallthru
          _
        // Predicated region
        $region93: #{tpu_custom_call.1} parent=79 // pred_check
          %p643 = pneg %p144
        $region94: #{tpu_custom_call.1} parent=79 // pred_check_branch
          %645 = sbr.rel (%p643) target = $region96
        $region95: #{tpu_custom_call.1} parent=79 // pred_region
          %646 = dma.done [#allocation12], 16
        $region96: #{tpu_custom_call.1} parent=79 // pred_fallthru
          _
        // Predicated region
        $region97: #{tpu_custom_call.1} parent=79 // pred_check
          %p647 = pneg %p165
        $region98: #{tpu_custom_call.1} parent=79 // pred_check_branch
          %649 = sbr.rel (%p647) target = $region100
        $region99: #{tpu_custom_call.1} parent=79 // pred_region
          %650 = dma.done [#allocation12], 256
        $region100: #{tpu_custom_call.1} parent=79 // pred_fallthru
          _
        // Predicated region
        $region101: #{tpu_custom_call.1} parent=79 // pred_check
          %p651 = pneg %p186
        $region102: #{tpu_custom_call.1} parent=79 // pred_check_branch
          %653 = sbr.rel (%p651) target = $region104
        $region103: #{tpu_custom_call.1} parent=79 // pred_region
          %654 = dma.done [#allocation15], 256
        $region104: #{tpu_custom_call.1} parent=79 // pred_fallthru
          _
        // Predicated region
        $region105: #{tpu_custom_call.1} parent=79 // pred_check
          %p655 = pneg %p207
        $region106: #{tpu_custom_call.1} parent=79 // pred_check_branch
          %657 = sbr.rel (%p655) target = $region108
        $region107: #{tpu_custom_call.1} parent=79 // pred_region
          %658 = dma.done [#allocation15], 256
        $region108: #{tpu_custom_call.1} parent=79 // pred_fallthru
          _
        // Predicated region
        $region109: #{tpu_custom_call.1} parent=79 // pred_check
          %p659 = pneg %p228
        $region110: #{tpu_custom_call.1} parent=79 // pred_check_branch
          %661 = sbr.rel (%p659) target = $region112
        $region111: #{tpu_custom_call.1} parent=79 // pred_region
          %662 = dma.done [#allocation18], 256
        $region112: #{tpu_custom_call.1} parent=79 // pred_fallthru
          _
        // Predicated region
        $region113: #{tpu_custom_call.1} parent=79 // pred_check
          %p663 = pneg %p249
        $region114: #{tpu_custom_call.1} parent=79 // pred_check_branch
          %665 = sbr.rel (%p663) target = $region116
        $region115: #{tpu_custom_call.1} parent=79 // pred_region
          %666 = dma.done [#allocation18], 16
        $region116: #{tpu_custom_call.1} parent=79 // pred_fallthru
          _
        // Predicated region
        $region117: #{tpu_custom_call.1} parent=79 // pred_check
          %p667 = pneg %p270
        $region118: #{tpu_custom_call.1} parent=79 // pred_check_branch
          %669 = sbr.rel (%p667) target = $region120
        $region119: #{tpu_custom_call.1} parent=79 // pred_region
          %670 = dma.done [#allocation21], 16
        $region120: #{tpu_custom_call.1} parent=79 // pred_fallthru
          _
        // Predicated region
        $region121: #{tpu_custom_call.1} parent=79 // pred_check
          %p671 = pneg %p291
        $region122: #{tpu_custom_call.1} parent=79 // pred_check_branch
          %673 = sbr.rel (%p671) target = $region124
        $region123: #{tpu_custom_call.1} parent=79 // pred_region
          %674 = dma.done [#allocation21], 16
        $region124: #{tpu_custom_call.1} parent=79 // pred_fallthru
          _
        // Predicated region
        $region125: #{tpu_custom_call.1} parent=79 // pred_check
          %p675 = pneg %p312
        $region126: #{tpu_custom_call.1} parent=79 // pred_check_branch
          %677 = sbr.rel (%p675) target = $region128
        $region127: #{tpu_custom_call.1} parent=79 // pred_region
          %678 = dma.done [#allocation24], 256
        $region128: #{tpu_custom_call.1} parent=79 // pred_fallthru
          _
        // Predicated region
        $region129: #{tpu_custom_call.1} parent=79 // pred_check
          %p679 = pneg %p333
        $region130: #{tpu_custom_call.1} parent=79 // pred_check_branch
          %681 = sbr.rel (%p679) target = $region132
        $region131: #{tpu_custom_call.1} parent=79 // pred_region
          %682 = dma.done [#allocation24], 16
        $region132: #{tpu_custom_call.1} parent=79 // pred_fallthru
          _
        // Predicated region
        $region133: #{tpu_custom_call.1} parent=79 // pred_check
          %p683 = pneg %p354
        $region134: #{tpu_custom_call.1} parent=79 // pred_check_branch
          %685 = sbr.rel (%p683) target = $region136
        $region135: #{tpu_custom_call.1} parent=79 // pred_region
          %686 = dma.done [#allocation27], 1024
        $region136: #{tpu_custom_call.1} parent=79 // pred_fallthru
          _
        // Predicated region
        $region137: #{tpu_custom_call.1} parent=79 // pred_check
          %p687 = pneg %p375
        $region138: #{tpu_custom_call.1} parent=79 // pred_check_branch
          %689 = sbr.rel (%p687) target = $region140
        $region139: #{tpu_custom_call.1} parent=79 // pred_region
          %690 = dma.done [#allocation27], 16
        $region140: #{tpu_custom_call.1} parent=79 // pred_fallthru
          _
        %s691 = sand.u32 %s61, 1
        %s692 = scalar_lea.sflag [#allocation6], %s691
        %s693 = sand.u32 %s61, 1
        %s694 = smul.addr %s693, 8
        %s695 = scalar_lea.vmem [#allocation5], %s694
        %p696 = pneg %p74
        %p697 = pneg %p71
        %s698 = sand.u32 %s41, 1
        %s699 = scalar_lea.sflag [#allocation9], %s698
        %s700 = sand.u32 %s89, 1
        %s701 = smul.addr %s700, 8
        %s702 = scalar_lea.vmem [#allocation8], %s701
        %p703 = pneg %p102
        %p704 = pneg %p99
        %p705 = pneg %p123
        %p706 = pneg %p120
        %p707 = pneg %p144
        %p708 = pneg %p141
        %p709 = pneg %p165
        %p710 = pneg %p162
        %p711 = pneg %p186
        %p712 = pneg %p183
        %p713 = pneg %p207
        %p714 = pneg %p204
        %p715 = pneg %p228
        %p716 = pneg %p225
        %p717 = pneg %p249
        %p718 = pneg %p246
        %p719 = pneg %p270
        %p720 = pneg %p267
        %p721 = pneg %p291
        %p722 = pneg %p288
        %p723 = pneg %p312
        %p724 = pneg %p309
        %p725 = pneg %p333
        %p726 = pneg %p330
        %p727 = pneg %p354
        %p728 = pneg %p351
        %p729 = pneg %p375
        %p730 = pneg %p372
        %p731 = pneg %p403
        %p732 = pneg %p400
        %s733 = sand.u32 %s390, 1
        %s734 = scalar_lea.sflag [#allocation7], %s733
        %s735 = sand.u32 %s390, 1
        %s736 = smul.addr %s735, 8
        %s737 = scalar_lea.vmem [#allocation29], %s736
        %p739 = scmp.eq.s32.totalorder %s46, 0
        // Predicated region
        $region141: #{tpu_custom_call.1} parent=79 // pred_check
          %p740 = pneg %p739
        $region142: #{tpu_custom_call.1} parent=79 // pred_check_branch
          %742 = sbr.rel (%p740) target = $region144
        $region143: #{tpu_custom_call.1} parent=79 // pred_region
          %v743 = vld [vmem:[%s625] sm:$0xff]
          %v744 = vld [vmem:[#allocation10] sm:$0x1]
          %v745 = vld [vmem:[#allocation11] sm:$0x1]
          %vm746 = vcmask 261120
          %v747 = vsel %vm746, %v743, 0.0
          %748 = vadd.xlane.f32.xlu0 %v747
          %v749 = vpop.xlane.xlu0 %748
          %v750 = vrcp.pop 32.0
          %v751 = vmul.f32 %v749, %v750
          %v752 = vsub.f32 %v743, %v751
          %v753 = vmul.f32 %v752, %v752
          %v754 = vsel %vm746, %v753, 0.0
          %755 = vadd.xlane.f32.xlu0 %v754
          %v756 = vpop.xlane.xlu0 %755
          %v757 = vmul.f32 %v756, %v750
          %v758 = vadd.f32 %v757, 1e-05
          %v759 = vrsqrt.pop %v758
          %v760 = vmul.f32 %v752, %v759
          %v762 = vlaneseq
          %v763 = vshrl.u32 %v762, 7
          %v764 = vsub.s32 0, %v763
          %v765 = vrot.slane %v744, %v764
          %v767 = vmul.f32 %v765, %v760
          %v769 = vlaneseq
          %v770 = vshrl.u32 %v769, 7
          %v771 = vsub.s32 0, %v770
          %v772 = vrot.slane %v745, %v771
          %v774 = vadd.f32 %v767, %v772
          %v775 = vpack.c.bf16 %v774, %v774
          %v776 = vld [vmem:[#allocation14] sm:$0xf]
          %v777 = vld [vmem:[#allocation14 + $0x4] sm:$0xf]
          %v778 = vld [vmem:[#allocation14 + $0x8] sm:$0xf]
          %v779 = vld [vmem:[#allocation14 + $0xc] sm:$0xf]
          %v784 = vunpack.c.l.b16 %v776
          %v785 = vunpack.c.l.b16 %v777
          %v786 = vunpack.c.l.b16 %v778
          %v787 = vunpack.c.l.b16 %v779
          %v788 = vpack.c.b16 %v785, %v784
          %v789 = vpack.c.b16 %v787, %v786
          %v793 = vsel %vm746, %v775, 0
          %795 = vmatprep.subr.bf16.mxu0 0
          %796 = vmatpush1.bf16.msra.mxu0 %v788
          %797 = vmatprep.subr.bf16.mxu0 0
          %798 = vmatpush1.bf16.msra.mxu0 %v789
          %799 = vmatprep.subr.bf16.mxu0 0
          %800 = vmatpush1.bf16.msra.mxu0 0
          %801 = vmatprep.subr.bf16.mxu0 0
          %802 = vmatpush1.bf16.msra.mxu0 0
          %803 = vmatprep.subr.bf16.mxu0 0
          %804 = vmatpush1.bf16.msra.mxu0 0
          %805 = vmatprep.subr.bf16.mxu0 0
          %806 = vmatpush1.bf16.msra.mxu0 0
          %807 = vmatprep.subr.bf16.mxu0 0
          %808 = vmatpush1.bf16.msra.mxu0 0
          %809 = vmatprep.subr.bf16.mxu0 0
          %810 = vmatpush1.bf16.msra.mxu0 0
          %811 = vmatprep.subr.bf16.mxu0 0
          %812 = vmatpush1.bf16.msra.mxu0 0
          %813 = vmatprep.subr.bf16.mxu0 0
          %814 = vmatpush1.bf16.msra.mxu0 0
          %815 = vmatprep.subr.bf16.mxu0 0
          %816 = vmatpush1.bf16.msra.mxu0 0
          %817 = vmatprep.subr.bf16.mxu0 0
          %818 = vmatpush1.bf16.msra.mxu0 0
          %819 = vmatprep.subr.bf16.mxu0 0
          %820 = vmatpush1.bf16.msra.mxu0 0
          %821 = vmatprep.subr.bf16.mxu0 0
          %822 = vmatpush1.bf16.msra.mxu0 0
          %823 = vmatprep.subr.bf16.mxu0 0
          %824 = vmatpush1.bf16.msra.mxu0 0
          %825 = vmatprep.subr.bf16.mxu0 0
          %826 = vmatpush1.bf16.msra.mxu0 0
          %827 = vmatprep.mubr.bf16.mxu0 0
          %828 = vmatmul.mubr.bf16.gmra.mrb[0].mxu0 %v793
          %v829 = vpop.f32.mrb[0].mxu0
          %v830 = vadd.f32 0.0, %v829
          %v831 = vpop.f32.mrb[0].mxu0
          %v832 = vpop.f32.mrb[0].mxu0
          %v833 = vpop.f32.mrb[0].mxu0
          %834 = vdwg.mxu0
          %v835 = vpack.c.bf16 %v830, %v830
          %vm836 = vcmask 257024
          %837 = vst.msk [vmem:[#allocation2] sm:$0xf] %vm836, %v835
          %v838 = vld [vmem:[#allocation16] sm:$0xf]
          %v839 = vld [vmem:[#allocation16 + $0x4] sm:$0xf]
          %v840 = vld [vmem:[#allocation16 + $0x8] sm:$0xf]
          %v841 = vld [vmem:[#allocation16 + $0xc] sm:$0xf]
          %v846 = vunpack.c.l.b16 %v838
          %v847 = vunpack.c.l.b16 %v839
          %v848 = vunpack.c.l.b16 %v840
          %v849 = vunpack.c.l.b16 %v841
          %v850 = vpack.c.b16 %v847, %v846
          %v851 = vpack.c.b16 %v849, %v848
          %854 = vmatprep.subr.bf16.mxu0 0
          %855 = vmatpush1.bf16.msra.mxu0 %v850
          %856 = vmatprep.subr.bf16.mxu0 0
          %857 = vmatpush1.bf16.msra.mxu0 %v851
          %858 = vmatprep.subr.bf16.mxu0 0
          %859 = vmatpush1.bf16.msra.mxu0 0
          %860 = vmatprep.subr.bf16.mxu0 0
          %861 = vmatpush1.bf16.msra.mxu0 0
          %862 = vmatprep.subr.bf16.mxu0 0
          %863 = vmatpush1.bf16.msra.mxu0 0
          %864 = vmatprep.subr.bf16.mxu0 0
          %865 = vmatpush1.bf16.msra.mxu0 0
          %866 = vmatprep.subr.bf16.mxu0 0
          %867 = vmatpush1.bf16.msra.mxu0 0
          %868 = vmatprep.subr.bf16.mxu0 0
          %869 = vmatpush1.bf16.msra.mxu0 0
          %870 = vmatprep.subr.bf16.mxu0 0
          %871 = vmatpush1.bf16.msra.mxu0 0
          %872 = vmatprep.subr.bf16.mxu0 0
          %873 = vmatpush1.bf16.msra.mxu0 0
          %874 = vmatprep.subr.bf16.mxu0 0
          %875 = vmatpush1.bf16.msra.mxu0 0
          %876 = vmatprep.subr.bf16.mxu0 0
          %877 = vmatpush1.bf16.msra.mxu0 0
          %878 = vmatprep.subr.bf16.mxu0 0
          %879 = vmatpush1.bf16.msra.mxu0 0
          %880 = vmatprep.subr.bf16.mxu0 0
          %881 = vmatpush1.bf16.msra.mxu0 0
          %882 = vmatprep.subr.bf16.mxu0 0
          %883 = vmatpush1.bf16.msra.mxu0 0
          %884 = vmatprep.subr.bf16.mxu0 0
          %885 = vmatpush1.bf16.msra.mxu0 0
          %886 = vmatprep.mubr.bf16.mxu0 0
          %887 = vmatmul.mubr.bf16.gmra.mrb[0].mxu0 %v793
          %v888 = vpop.f32.mrb[0].mxu0
          %v889 = vadd.f32 0.0, %v888
          %v890 = vpop.f32.mrb[0].mxu0
          %v891 = vpop.f32.mrb[0].mxu0
          %v892 = vpop.f32.mrb[0].mxu0
          %893 = vdwg.mxu0
          %v894 = vpack.c.bf16 %v889, %v889
          %895 = vst.msk [vmem:[#allocation3] sm:$0xf] %vm836, %v894
        $region144: #{tpu_custom_call.1} parent=79 // pred_fallthru
          _
        %v896 = vld [vmem:[%s634] sm:$0xff]
        %v897 = vld [vmem:[#allocation10] sm:$0x1]
        %v898 = vld [vmem:[#allocation11] sm:$0x1]
        %vm899 = vcmask 261120
        %v900 = vsel %vm899, %v896, 0.0
        %901 = vadd.xlane.f32.xlu0 %v900
        %v902 = vpop.xlane.xlu0 %901
        %v903 = vrcp.pop 32.0
        %v904 = vmul.f32 %v902, %v903
        %v905 = vsub.f32 %v896, %v904
        %v906 = vmul.f32 %v905, %v905
        %v907 = vsel %vm899, %v906, 0.0
        %908 = vadd.xlane.f32.xlu0 %v907
        %v909 = vpop.xlane.xlu0 %908
        %v910 = vmul.f32 %v909, %v903
        %v911 = vadd.f32 %v910, 1e-05
        %v912 = vrsqrt.pop %v911
        %v913 = vmul.f32 %v905, %v912
        %v915 = vlaneseq
        %v916 = vshrl.u32 %v915, 7
        %v917 = vsub.s32 0, %v916
        %v918 = vrot.slane %v897, %v917
        %v920 = vmul.f32 %v918, %v913
        %v922 = vlaneseq
        %v923 = vshrl.u32 %v922, 7
        %v924 = vsub.s32 0, %v923
        %v925 = vrot.slane %v898, %v924
        %v927 = vadd.f32 %v920, %v925
        %v928 = vpack.c.bf16 %v927, %v927
        %v929 = vld [vmem:[#allocation13] sm:$0xf]
        %v930 = vld [vmem:[#allocation13 + $0x4] sm:$0xf]
        %v931 = vld [vmem:[#allocation13 + $0x8] sm:$0xf]
        %v932 = vld [vmem:[#allocation13 + $0xc] sm:$0xf]
        %v937 = vunpack.c.l.b16 %v929
        %v938 = vunpack.c.l.b16 %v930
        %v939 = vunpack.c.l.b16 %v931
        %v940 = vunpack.c.l.b16 %v932
        %v941 = vpack.c.b16 %v938, %v937
        %v942 = vpack.c.b16 %v940, %v939
        %v946 = vsel %vm899, %v928, 0
        %948 = vmatprep.subr.bf16.mxu0 0
        %949 = vmatpush1.bf16.msra.mxu0 %v941
        %950 = vmatprep.subr.bf16.mxu0 0
        %951 = vmatpush1.bf16.msra.mxu0 %v942
        %952 = vmatprep.subr.bf16.mxu0 0
        %953 = vmatpush1.bf16.msra.mxu0 0
        %954 = vmatprep.subr.bf16.mxu0 0
        %955 = vmatpush1.bf16.msra.mxu0 0
        %956 = vmatprep.subr.bf16.mxu0 0
        %957 = vmatpush1.bf16.msra.mxu0 0
        %958 = vmatprep.subr.bf16.mxu0 0
        %959 = vmatpush1.bf16.msra.mxu0 0
        %960 = vmatprep.subr.bf16.mxu0 0
        %961 = vmatpush1.bf16.msra.mxu0 0
        %962 = vmatprep.subr.bf16.mxu0 0
        %963 = vmatpush1.bf16.msra.mxu0 0
        %964 = vmatprep.subr.bf16.mxu0 0
        %965 = vmatpush1.bf16.msra.mxu0 0
        %966 = vmatprep.subr.bf16.mxu0 0
        %967 = vmatpush1.bf16.msra.mxu0 0
        %968 = vmatprep.subr.bf16.mxu0 0
        %969 = vmatpush1.bf16.msra.mxu0 0
        %970 = vmatprep.subr.bf16.mxu0 0
        %971 = vmatpush1.bf16.msra.mxu0 0
        %972 = vmatprep.subr.bf16.mxu0 0
        %973 = vmatpush1.bf16.msra.mxu0 0
        %974 = vmatprep.subr.bf16.mxu0 0
        %975 = vmatpush1.bf16.msra.mxu0 0
        %976 = vmatprep.subr.bf16.mxu0 0
        %977 = vmatpush1.bf16.msra.mxu0 0
        %978 = vmatprep.subr.bf16.mxu0 0
        %979 = vmatpush1.bf16.msra.mxu0 0
        %980 = vmatprep.mubr.bf16.mxu0 0
        %981 = vmatmul.mubr.bf16.gmra.mrb[0].mxu0 %v946
        %v982 = vpop.f32.mrb[0].mxu0
        %v983 = vadd.f32 0.0, %v982
        %v984 = vpop.f32.mrb[0].mxu0
        %v985 = vpop.f32.mrb[0].mxu0
        %v986 = vpop.f32.mrb[0].mxu0
        %987 = vdwg.mxu0
        %s988 = smul.u32 %s46, 8
        %v989 = vlaneseq
        %v990 = vshrl.u32 %v989, 7
        %v991 = vstv %s988
        %v992 = vadd.s32 %v991, %v990
        %v993 = vlaneseq
        %v994 = vand.u32 %v993, 127
        %vm995 = vcmp.le.s32.totalorder %v994, %v992
        %v996 = vsel %vm995, 0.0, -1e+30
        %v997 = vpack.c.bf16 %v983, %v983
        %v998 = vld [vmem:[#allocation2] sm:$0xf]
        %v999 = vld [vmem:[#allocation3] sm:$0xf]
        %vm1000 = vcmask 64512
        %v1002 = vsel %vm1000, %v997, 0
        %v1005 = vsel %vm1000, %v998, 0
        %1007 = vmatprep.subr.bf16.mxu0 0
        %1008 = vmatpush1.bf16.xpose.msra.mxu0 %v1005
        %1009 = vmatprep.subr.bf16.mxu0 0
        %1010 = vmatpush1.bf16.xpose.msra.mxu0 0
        %1011 = vmatprep.subr.bf16.mxu0 0
        %1012 = vmatpush1.bf16.xpose.msra.mxu0 0
        %1013 = vmatprep.subr.bf16.mxu0 0
        %1014 = vmatpush1.bf16.xpose.msra.mxu0 0
        %1015 = vmatprep.subr.bf16.mxu0 0
        %1016 = vmatpush1.bf16.xpose.msra.mxu0 0
        %1017 = vmatprep.subr.bf16.mxu0 0
        %1018 = vmatpush1.bf16.xpose.msra.mxu0 0
        %1019 = vmatprep.subr.bf16.mxu0 0
        %1020 = vmatpush1.bf16.xpose.msra.mxu0 0
        %1021 = vmatprep.subr.bf16.mxu0 0
        %1022 = vmatpush1.bf16.xpose.msra.mxu0 0
        %1023 = vmatprep.subr.bf16.mxu0 0
        %1024 = vmatpush1.bf16.xpose.msra.mxu0 0
        %1025 = vmatprep.subr.bf16.mxu0 0
        %1026 = vmatpush1.bf16.xpose.msra.mxu0 0
        %1027 = vmatprep.subr.bf16.mxu0 0
        %1028 = vmatpush1.bf16.xpose.msra.mxu0 0
        %1029 = vmatprep.subr.bf16.mxu0 0
        %1030 = vmatpush1.bf16.xpose.msra.mxu0 0
        %1031 = vmatprep.subr.bf16.mxu0 0
        %1032 = vmatpush1.bf16.xpose.msra.mxu0 0
        %1033 = vmatprep.subr.bf16.mxu0 0
        %1034 = vmatpush1.bf16.xpose.msra.mxu0 0
        %1035 = vmatprep.subr.bf16.mxu0 0
        %1036 = vmatpush1.bf16.xpose.msra.mxu0 0
        %1037 = vmatprep.subr.bf16.mxu0 0
        %1038 = vmatpush1.bf16.xpose.msra.mxu0 0
        %1039 = vmatprep.mubr.bf16.mxu0 0
        %1040 = vmatmul.mubr.bf16.gmra.mrb[0].mxu0 %v1002
        %v1041 = vpop.f32.mrb[0].mxu0
        %v1042 = vadd.f32 0.0, %v1041
        %v1043 = vpop.f32.mrb[0].mxu0
        %v1044 = vpop.f32.mrb[0].mxu0
        %v1045 = vpop.f32.mrb[0].mxu0
        %1046 = vdwg.mxu0
        %v1047 = vmul.f32 %v1042, 0.35355338
        %v1048 = vadd.f32 %v1047, %v996
        %v1049 = vsel %vm1000, %v1048, -inf
        %1050 = vmax.xlane.f32.xlu0 %v1049
        %v1051 = vpop.xlane.xlu0 %1050
        %v1052 = vsub.f32 %v1048, %v1051
        %v1053 = vmul.f32 %v1052, 1.442695
        %v1054 = vpow.pop %v1053
        %v1055 = vsel %vm1000, %v1054, 0.0
        %1056 = vadd.xlane.f32.xlu0 %v1055
        %v1057 = vpop.xlane.xlu0 %1056
        %v1058 = vrcp.pop %v1057
        %v1059 = vmul.f32 %v1054, %v1058
        %v1060 = vpack.c.bf16 %v1059, %v1059
        %v1062 = vsel %vm1000, %v1060, 0
        %vm1064 = vcmask 1043456
        %v1066 = vsel %vm1064, %v999, 0
        %1068 = vmatprep.subr.bf16.mxu0 0
        %1069 = vmatpush1.bf16.msra.mxu0 %v1066
        %1070 = vmatprep.subr.bf16.mxu0 0
        %1071 = vmatpush1.bf16.msra.mxu0 0
        %1072 = vmatprep.subr.bf16.mxu0 0
        %1073 = vmatpush1.bf16.msra.mxu0 0
        %1074 = vmatprep.subr.bf16.mxu0 0
        %1075 = vmatpush1.bf16.msra.mxu0 0
        %1076 = vmatprep.subr.bf16.mxu0 0
        %1077 = vmatpush1.bf16.msra.mxu0 0
        %1078 = vmatprep.subr.bf16.mxu0 0
        %1079 = vmatpush1.bf16.msra.mxu0 0
        %1080 = vmatprep.subr.bf16.mxu0 0
        %1081 = vmatpush1.bf16.msra.mxu0 0
        %1082 = vmatprep.subr.bf16.mxu0 0
        %1083 = vmatpush1.bf16.msra.mxu0 0
        %1084 = vmatprep.subr.bf16.mxu0 0
        %1085 = vmatpush1.bf16.msra.mxu0 0
        %1086 = vmatprep.subr.bf16.mxu0 0
        %1087 = vmatpush1.bf16.msra.mxu0 0
        %1088 = vmatprep.subr.bf16.mxu0 0
        %1089 = vmatpush1.bf16.msra.mxu0 0
        %1090 = vmatprep.subr.bf16.mxu0 0
        %1091 = vmatpush1.bf16.msra.mxu0 0
        %1092 = vmatprep.subr.bf16.mxu0 0
        %1093 = vmatpush1.bf16.msra.mxu0 0
        %1094 = vmatprep.subr.bf16.mxu0 0
        %1095 = vmatpush1.bf16.msra.mxu0 0
        %1096 = vmatprep.subr.bf16.mxu0 0
        %1097 = vmatpush1.bf16.msra.mxu0 0
        %1098 = vmatprep.subr.bf16.mxu0 0
        %1099 = vmatpush1.bf16.msra.mxu0 0
        %1100 = vmatprep.mubr.bf16.mxu0 0
        %1101 = vmatmul.mubr.bf16.gmra.mrb[0].mxu0 %v1062
        %v1102 = vpop.f32.mrb[0].mxu0
        %v1103 = vadd.f32 0.0, %v1102
        %v1104 = vpop.f32.mrb[0].mxu0
        %v1105 = vpop.f32.mrb[0].mxu0
        %v1106 = vpop.f32.mrb[0].mxu0
        %1107 = vdwg.mxu0
        %v1108 = vpack.c.bf16 %v1103, %v1103
        %vm1109 = vcmask 60416
        %1110 = vst.msk [vmem:[#allocation4] sm:$0xf] %vm1109, %v1108
        %v1111 = vld [vmem:[#allocation2] sm:$0xf]
        %v1112 = vld [vmem:[#allocation3] sm:$0xf]
        %1114 = vrot.lane.b32.xlu0 %v997, 120
        %v1115 = vpop.permute.xlu0 %1114
        %v1117 = vunpack.c.l.b16 %v1111
        %v1118 = vpack.c.b16 %v1117, %v1117
        %1119 = vrot.lane.b32.xlu0 %v1118, 120
        %v1120 = vpop.permute.xlu0 %1119
        %v1122 = vsel %vm1000, %v1115, 0
        %v1125 = vsel %vm1000, %v1120, 0
        %1127 = vmatprep.subr.bf16.mxu0 0
        %1128 = vmatpush1.bf16.xpose.msra.mxu0 %v1125
        %1129 = vmatprep.subr.bf16.mxu0 0
        %1130 = vmatpush1.bf16.xpose.msra.mxu0 0
        %1131 = vmatprep.subr.bf16.mxu0 0
        %1132 = vmatpush1.bf16.xpose.msra.mxu0 0
        %1133 = vmatprep.subr.bf16.mxu0 0
        %1134 = vmatpush1.bf16.xpose.msra.mxu0 0
        %1135 = vmatprep.subr.bf16.mxu0 0
        %1136 = vmatpush1.bf16.xpose.msra.mxu0 0
        %1137 = vmatprep.subr.bf16.mxu0 0
        %1138 = vmatpush1.bf16.xpose.msra.mxu0 0
        %1139 = vmatprep.subr.bf16.mxu0 0
        %1140 = vmatpush1.bf16.xpose.msra.mxu0 0
        %1141 = vmatprep.subr.bf16.mxu0 0
        %1142 = vmatpush1.bf16.xpose.msra.mxu0 0
        %1143 = vmatprep.subr.bf16.mxu0 0
        %1144 = vmatpush1.bf16.xpose.msra.mxu0 0
        %1145 = vmatprep.subr.bf16.mxu0 0
        %1146 = vmatpush1.bf16.xpose.msra.mxu0 0
        %1147 = vmatprep.subr.bf16.mxu0 0
        %1148 = vmatpush1.bf16.xpose.msra.mxu0 0
        %1149 = vmatprep.subr.bf16.mxu0 0
        %1150 = vmatpush1.bf16.xpose.msra.mxu0 0
        %1151 = vmatprep.subr.bf16.mxu0 0
        %1152 = vmatpush1.bf16.xpose.msra.mxu0 0
        %1153 = vmatprep.subr.bf16.mxu0 0
        %1154 = vmatpush1.bf16.xpose.msra.mxu0 0
        %1155 = vmatprep.subr.bf16.mxu0 0
        %1156 = vmatpush1.bf16.xpose.msra.mxu0 0
        %1157 = vmatprep.subr.bf16.mxu0 0
        %1158 = vmatpush1.bf16.xpose.msra.mxu0 0
        %1159 = vmatprep.mubr.bf16.mxu0 0
        %1160 = vmatmul.mubr.bf16.gmra.mrb[0].mxu0 %v1122
        %v1161 = vpop.f32.mrb[0].mxu0
        %v1162 = vadd.f32 0.0, %v1161
        %v1163 = vpop.f32.mrb[0].mxu0
        %v1164 = vpop.f32.mrb[0].mxu0
        %v1165 = vpop.f32.mrb[0].mxu0
        %1166 = vdwg.mxu0
        %v1167 = vmul.f32 %v1162, 0.35355338
        %v1168 = vadd.f32 %v1167, %v996
        %v1169 = vsel %vm1000, %v1168, -inf
        %1170 = vmax.xlane.f32.xlu0 %v1169
        %v1171 = vpop.xlane.xlu0 %1170
        %v1172 = vsub.f32 %v1168, %v1171
        %v1173 = vmul.f32 %v1172, 1.442695
        %v1174 = vpow.pop %v1173
        %v1175 = vsel %vm1000, %v1174, 0.0
        %1176 = vadd.xlane.f32.xlu0 %v1175
        %v1177 = vpop.xlane.xlu0 %1176
        %v1178 = vrcp.pop %v1177
        %v1179 = vmul.f32 %v1174, %v1178
        %v1180 = vpack.c.bf16 %v1179, %v1179
        %v1182 = vunpack.c.l.b16 %v1112
        %v1183 = vpack.c.b16 %v1182, %v1182
        %1184 = vrot.lane.b32.xlu0 %v1183, 120
        %v1185 = vpop.permute.xlu0 %1184
        %v1187 = vsel %vm1000, %v1180, 0
        %v1190 = vsel %vm1064, %v1185, 0
        %1192 = vmatprep.subr.bf16.mxu0 0
        %1193 = vmatpush1.bf16.msra.mxu0 %v1190
        %1194 = vmatprep.subr.bf16.mxu0 0
        %1195 = vmatpush1.bf16.msra.mxu0 0
        %1196 = vmatprep.subr.bf16.mxu0 0
        %1197 = vmatpush1.bf16.msra.mxu0 0
        %1198 = vmatprep.subr.bf16.mxu0 0
        %1199 = vmatpush1.bf16.msra.mxu0 0
        %1200 = vmatprep.subr.bf16.mxu0 0
        %1201 = vmatpush1.bf16.msra.mxu0 0
        %1202 = vmatprep.subr.bf16.mxu0 0
        %1203 = vmatpush1.bf16.msra.mxu0 0
        %1204 = vmatprep.subr.bf16.mxu0 0
        %1205 = vmatpush1.bf16.msra.mxu0 0
        %1206 = vmatprep.subr.bf16.mxu0 0
        %1207 = vmatpush1.bf16.msra.mxu0 0
        %1208 = vmatprep.subr.bf16.mxu0 0
        %1209 = vmatpush1.bf16.msra.mxu0 0
        %1210 = vmatprep.subr.bf16.mxu0 0
        %1211 = vmatpush1.bf16.msra.mxu0 0
        %1212 = vmatprep.subr.bf16.mxu0 0
        %1213 = vmatpush1.bf16.msra.mxu0 0
        %1214 = vmatprep.subr.bf16.mxu0 0
        %1215 = vmatpush1.bf16.msra.mxu0 0
        %1216 = vmatprep.subr.bf16.mxu0 0
        %1217 = vmatpush1.bf16.msra.mxu0 0
        %1218 = vmatprep.subr.bf16.mxu0 0
        %1219 = vmatpush1.bf16.msra.mxu0 0
        %1220 = vmatprep.subr.bf16.mxu0 0
        %1221 = vmatpush1.bf16.msra.mxu0 0
        %1222 = vmatprep.subr.bf16.mxu0 0
        %1223 = vmatpush1.bf16.msra.mxu0 0
        %1224 = vmatprep.mubr.bf16.mxu0 0
        %1225 = vmatmul.mubr.bf16.gmra.mrb[0].mxu0 %v1187
        %v1226 = vpop.f32.mrb[0].mxu0
        %v1227 = vadd.f32 0.0, %v1226
        %v1228 = vpop.f32.mrb[0].mxu0
        %v1229 = vpop.f32.mrb[0].mxu0
        %v1230 = vpop.f32.mrb[0].mxu0
        %1231 = vdwg.mxu0
        %v1232 = vpack.c.bf16 %v1227, %v1227
        %v1234 = vunpack.c.l.b16 %v1232
        %v1235 = vpack.c.b16 %v1234, %v1234
        %1236 = vrot.lane.b32.xlu0 %v1235, 8
        %v1237 = vpop.permute.xlu0 %1236
        %vm1239 = vcmask 126016
        %1240 = vst.msk [vmem:[#allocation4] sm:$0xf] %vm1239, %v1237
        %v1241 = vld [vmem:[#allocation2] sm:$0xf]
        %v1242 = vld [vmem:[#allocation3] sm:$0xf]
        %1243 = vrot.lane.b32.xlu0 %v997, 112
        %v1244 = vpop.permute.xlu0 %1243
        %v1246 = vunpack.c.l.b16 %v1241
        %v1247 = vpack.c.b16 %v1246, %v1246
        %1248 = vrot.lane.b32.xlu0 %v1247, 112
        %v1249 = vpop.permute.xlu0 %1248
        %v1251 = vsel %vm1000, %v1244, 0
        %v1254 = vsel %vm1000, %v1249, 0
        %1256 = vmatprep.subr.bf16.mxu0 0
        %1257 = vmatpush1.bf16.xpose.msra.mxu0 %v1254
        %1258 = vmatprep.subr.bf16.mxu0 0
        %1259 = vmatpush1.bf16.xpose.msra.mxu0 0
        %1260 = vmatprep.subr.bf16.mxu0 0
        %1261 = vmatpush1.bf16.xpose.msra.mxu0 0
        %1262 = vmatprep.subr.bf16.mxu0 0
        %1263 = vmatpush1.bf16.xpose.msra.mxu0 0
        %1264 = vmatprep.subr.bf16.mxu0 0
        %1265 = vmatpush1.bf16.xpose.msra.mxu0 0
        %1266 = vmatprep.subr.bf16.mxu0 0
        %1267 = vmatpush1.bf16.xpose.msra.mxu0 0
        %1268 = vmatprep.subr.bf16.mxu0 0
        %1269 = vmatpush1.bf16.xpose.msra.mxu0 0
        %1270 = vmatprep.subr.bf16.mxu0 0
        %1271 = vmatpush1.bf16.xpose.msra.mxu0 0
        %1272 = vmatprep.subr.bf16.mxu0 0
        %1273 = vmatpush1.bf16.xpose.msra.mxu0 0
        %1274 = vmatprep.subr.bf16.mxu0 0
        %1275 = vmatpush1.bf16.xpose.msra.mxu0 0
        %1276 = vmatprep.subr.bf16.mxu0 0
        %1277 = vmatpush1.bf16.xpose.msra.mxu0 0
        %1278 = vmatprep.subr.bf16.mxu0 0
        %1279 = vmatpush1.bf16.xpose.msra.mxu0 0
        %1280 = vmatprep.subr.bf16.mxu0 0
        %1281 = vmatpush1.bf16.xpose.msra.mxu0 0
        %1282 = vmatprep.subr.bf16.mxu0 0
        %1283 = vmatpush1.bf16.xpose.msra.mxu0 0
        %1284 = vmatprep.subr.bf16.mxu0 0
        %1285 = vmatpush1.bf16.xpose.msra.mxu0 0
        %1286 = vmatprep.subr.bf16.mxu0 0
        %1287 = vmatpush1.bf16.xpose.msra.mxu0 0
        %1288 = vmatprep.mubr.bf16.mxu0 0
        %1289 = vmatmul.mubr.bf16.gmra.mrb[0].mxu0 %v1251
        %v1290 = vpop.f32.mrb[0].mxu0
        %v1291 = vadd.f32 0.0, %v1290
        %v1292 = vpop.f32.mrb[0].mxu0
        %v1293 = vpop.f32.mrb[0].mxu0
        %v1294 = vpop.f32.mrb[0].mxu0
        %1295 = vdwg.mxu0
        %v1296 = vmul.f32 %v1291, 0.35355338
        %v1297 = vadd.f32 %v1296, %v996
        %v1298 = vsel %vm1000, %v1297, -inf
        %1299 = vmax.xlane.f32.xlu0 %v1298
        %v1300 = vpop.xlane.xlu0 %1299
        %v1301 = vsub.f32 %v1297, %v1300
        %v1302 = vmul.f32 %v1301, 1.442695
        %v1303 = vpow.pop %v1302
        %v1304 = vsel %vm1000, %v1303, 0.0
        %1305 = vadd.xlane.f32.xlu0 %v1304
        %v1306 = vpop.xlane.xlu0 %1305
        %v1307 = vrcp.pop %v1306
        %v1308 = vmul.f32 %v1303, %v1307
        %v1309 = vpack.c.bf16 %v1308, %v1308
        %v1311 = vunpack.c.l.b16 %v1242
        %v1312 = vpack.c.b16 %v1311, %v1311
        %1313 = vrot.lane.b32.xlu0 %v1312, 112
        %v1314 = vpop.permute.xlu0 %1313
        %v1316 = vsel %vm1000, %v1309, 0
        %v1319 = vsel %vm1064, %v1314, 0
        %1321 = vmatprep.subr.bf16.mxu0 0
        %1322 = vmatpush1.bf16.msra.mxu0 %v1319
        %1323 = vmatprep.subr.bf16.mxu0 0
        %1324 = vmatpush1.bf16.msra.mxu0 0
        %1325 = vmatprep.subr.bf16.mxu0 0
        %1326 = vmatpush1.bf16.msra.mxu0 0
        %1327 = vmatprep.subr.bf16.mxu0 0
        %1328 = vmatpush1.bf16.msra.mxu0 0
        %1329 = vmatprep.subr.bf16.mxu0 0
        %1330 = vmatpush1.bf16.msra.mxu0 0
        %1331 = vmatprep.subr.bf16.mxu0 0
        %1332 = vmatpush1.bf16.msra.mxu0 0
        %1333 = vmatprep.subr.bf16.mxu0 0
        %1334 = vmatpush1.bf16.msra.mxu0 0
        %1335 = vmatprep.subr.bf16.mxu0 0
        %1336 = vmatpush1.bf16.msra.mxu0 0
        %1337 = vmatprep.subr.bf16.mxu0 0
        %1338 = vmatpush1.bf16.msra.mxu0 0
        %1339 = vmatprep.subr.bf16.mxu0 0
        %1340 = vmatpush1.bf16.msra.mxu0 0
        %1341 = vmatprep.subr.bf16.mxu0 0
        %1342 = vmatpush1.bf16.msra.mxu0 0
        %1343 = vmatprep.subr.bf16.mxu0 0
        %1344 = vmatpush1.bf16.msra.mxu0 0
        %1345 = vmatprep.subr.bf16.mxu0 0
        %1346 = vmatpush1.bf16.msra.mxu0 0
        %1347 = vmatprep.subr.bf16.mxu0 0
        %1348 = vmatpush1.bf16.msra.mxu0 0
        %1349 = vmatprep.subr.bf16.mxu0 0
        %1350 = vmatpush1.bf16.msra.mxu0 0
        %1351 = vmatprep.subr.bf16.mxu0 0
        %1352 = vmatpush1.bf16.msra.mxu0 0
        %1353 = vmatprep.mubr.bf16.mxu0 0
        %1354 = vmatmul.mubr.bf16.gmra.mrb[0].mxu0 %v1316
        %v1355 = vpop.f32.mrb[0].mxu0
        %v1356 = vadd.f32 0.0, %v1355
        %v1357 = vpop.f32.mrb[0].mxu0
        %v1358 = vpop.f32.mrb[0].mxu0
        %v1359 = vpop.f32.mrb[0].mxu0
        %1360 = vdwg.mxu0
        %v1361 = vpack.c.bf16 %v1356, %v1356
        %v1363 = vunpack.c.l.b16 %v1361
        %v1364 = vpack.c.b16 %v1363, %v1363
        %1365 = vrot.lane.b32.xlu0 %v1364, 16
        %v1366 = vpop.permute.xlu0 %1365
        %vm1368 = vcmask 191616
        %1369 = vst.msk [vmem:[#allocation4] sm:$0xf] %vm1368, %v1366
        %v1370 = vld [vmem:[#allocation2] sm:$0xf]
        %v1371 = vld [vmem:[#allocation3] sm:$0xf]
        %1372 = vrot.lane.b32.xlu0 %v997, 104
        %v1373 = vpop.permute.xlu0 %1372
        %v1375 = vunpack.c.l.b16 %v1370
        %v1376 = vpack.c.b16 %v1375, %v1375
        %1377 = vrot.lane.b32.xlu0 %v1376, 104
        %v1378 = vpop.permute.xlu0 %1377
        %v1380 = vsel %vm1000, %v1373, 0
        %v1383 = vsel %vm1000, %v1378, 0
        %1385 = vmatprep.subr.bf16.mxu0 0
        %1386 = vmatpush1.bf16.xpose.msra.mxu0 %v1383
        %1387 = vmatprep.subr.bf16.mxu0 0
        %1388 = vmatpush1.bf16.xpose.msra.mxu0 0
        %1389 = vmatprep.subr.bf16.mxu0 0
        %1390 = vmatpush1.bf16.xpose.msra.mxu0 0
        %1391 = vmatprep.subr.bf16.mxu0 0
        %1392 = vmatpush1.bf16.xpose.msra.mxu0 0
        %1393 = vmatprep.subr.bf16.mxu0 0
        %1394 = vmatpush1.bf16.xpose.msra.mxu0 0
        %1395 = vmatprep.subr.bf16.mxu0 0
        %1396 = vmatpush1.bf16.xpose.msra.mxu0 0
        %1397 = vmatprep.subr.bf16.mxu0 0
        %1398 = vmatpush1.bf16.xpose.msra.mxu0 0
        %1399 = vmatprep.subr.bf16.mxu0 0
        %1400 = vmatpush1.bf16.xpose.msra.mxu0 0
        %1401 = vmatprep.subr.bf16.mxu0 0
        %1402 = vmatpush1.bf16.xpose.msra.mxu0 0
        %1403 = vmatprep.subr.bf16.mxu0 0
        %1404 = vmatpush1.bf16.xpose.msra.mxu0 0
        %1405 = vmatprep.subr.bf16.mxu0 0
        %1406 = vmatpush1.bf16.xpose.msra.mxu0 0
        %1407 = vmatprep.subr.bf16.mxu0 0
        %1408 = vmatpush1.bf16.xpose.msra.mxu0 0
        %1409 = vmatprep.subr.bf16.mxu0 0
        %1410 = vmatpush1.bf16.xpose.msra.mxu0 0
        %1411 = vmatprep.subr.bf16.mxu0 0
        %1412 = vmatpush1.bf16.xpose.msra.mxu0 0
        %1413 = vmatprep.subr.bf16.mxu0 0
        %1414 = vmatpush1.bf16.xpose.msra.mxu0 0
        %1415 = vmatprep.subr.bf16.mxu0 0
        %1416 = vmatpush1.bf16.xpose.msra.mxu0 0
        %1417 = vmatprep.mubr.bf16.mxu0 0
        %1418 = vmatmul.mubr.bf16.gmra.mrb[0].mxu0 %v1380
        %v1419 = vpop.f32.mrb[0].mxu0
        %v1420 = vadd.f32 0.0, %v1419
        %v1421 = vpop.f32.mrb[0].mxu0
        %v1422 = vpop.f32.mrb[0].mxu0
        %v1423 = vpop.f32.mrb[0].mxu0
        %1424 = vdwg.mxu0
        %v1425 = vmul.f32 %v1420, 0.35355338
        %v1426 = vadd.f32 %v1425, %v996
        %v1427 = vsel %vm1000, %v1426, -inf
        %1428 = vmax.xlane.f32.xlu0 %v1427
        %v1429 = vpop.xlane.xlu0 %1428
        %v1430 = vsub.f32 %v1426, %v1429
        %v1431 = vmul.f32 %v1430, 1.442695
        %v1432 = vpow.pop %v1431
        %v1433 = vsel %vm1000, %v1432, 0.0
        %1434 = vadd.xlane.f32.xlu0 %v1433
        %v1435 = vpop.xlane.xlu0 %1434
        %v1436 = vrcp.pop %v1435
        %v1437 = vmul.f32 %v1432, %v1436
        %v1438 = vpack.c.bf16 %v1437, %v1437
        %v1440 = vunpack.c.l.b16 %v1371
        %v1441 = vpack.c.b16 %v1440, %v1440
        %1442 = vrot.lane.b32.xlu0 %v1441, 104
        %v1443 = vpop.permute.xlu0 %1442
        %v1445 = vsel %vm1000, %v1438, 0
        %v1448 = vsel %vm1064, %v1443, 0
        %1450 = vmatprep.subr.bf16.mxu0 0
        %1451 = vmatpush1.bf16.msra.mxu0 %v1448
        %1452 = vmatprep.subr.bf16.mxu0 0
        %1453 = vmatpush1.bf16.msra.mxu0 0
        %1454 = vmatprep.subr.bf16.mxu0 0
        %1455 = vmatpush1.bf16.msra.mxu0 0
        %1456 = vmatprep.subr.bf16.mxu0 0
        %1457 = vmatpush1.bf16.msra.mxu0 0
        %1458 = vmatprep.subr.bf16.mxu0 0
        %1459 = vmatpush1.bf16.msra.mxu0 0
        %1460 = vmatprep.subr.bf16.mxu0 0
        %1461 = vmatpush1.bf16.msra.mxu0 0
        %1462 = vmatprep.subr.bf16.mxu0 0
        %1463 = vmatpush1.bf16.msra.mxu0 0
        %1464 = vmatprep.subr.bf16.mxu0 0
        %1465 = vmatpush1.bf16.msra.mxu0 0
        %1466 = vmatprep.subr.bf16.mxu0 0
        %1467 = vmatpush1.bf16.msra.mxu0 0
        %1468 = vmatprep.subr.bf16.mxu0 0
        %1469 = vmatpush1.bf16.msra.mxu0 0
        %1470 = vmatprep.subr.bf16.mxu0 0
        %1471 = vmatpush1.bf16.msra.mxu0 0
        %1472 = vmatprep.subr.bf16.mxu0 0
        %1473 = vmatpush1.bf16.msra.mxu0 0
        %1474 = vmatprep.subr.bf16.mxu0 0
        %1475 = vmatpush1.bf16.msra.mxu0 0
        %1476 = vmatprep.subr.bf16.mxu0 0
        %1477 = vmatpush1.bf16.msra.mxu0 0
        %1478 = vmatprep.subr.bf16.mxu0 0
        %1479 = vmatpush1.bf16.msra.mxu0 0
        %1480 = vmatprep.subr.bf16.mxu0 0
        %1481 = vmatpush1.bf16.msra.mxu0 0
        %1482 = vmatprep.mubr.bf16.mxu0 0
        %1483 = vmatmul.mubr.bf16.gmra.mrb[0].mxu0 %v1445
        %v1484 = vpop.f32.mrb[0].mxu0
        %v1485 = vadd.f32 0.0, %v1484
        %v1486 = vpop.f32.mrb[0].mxu0
        %v1487 = vpop.f32.mrb[0].mxu0
        %v1488 = vpop.f32.mrb[0].mxu0
        %1489 = vdwg.mxu0
        %v1490 = vpack.c.bf16 %v1485, %v1485
        %v1492 = vunpack.c.l.b16 %v1490
        %v1493 = vpack.c.b16 %v1492, %v1492
        %1494 = vrot.lane.b32.xlu0 %v1493, 24
        %v1495 = vpop.permute.xlu0 %1494
        %vm1497 = vcmask 257216
        %1498 = vst.msk [vmem:[#allocation4] sm:$0xf] %vm1497, %v1495
        %v1499 = vld [vmem:[#allocation4] sm:$0xf]
        %v1500 = vld [vmem:[#allocation17] sm:$0xf]
        %v1501 = vld [vmem:[#allocation17 + $0x4] sm:$0xf]
        %v1502 = vld [vmem:[#allocation17 + $0x8] sm:$0xf]
        %v1503 = vld [vmem:[#allocation17 + $0xc] sm:$0xf]
        %v1504 = vld [vmem:[#allocation19] sm:$0x1]
        %v1506 = vlaneseq
        %v1507 = vshrl.u32 %v1506, 7
        %v1508 = vsub.s32 0, %v1507
        %v1509 = vrot.slane %v1504, %v1508
        %v1515 = vunpack.c.l.b16 %v1500
        %v1516 = vunpack.c.l.b16 %v1501
        %v1517 = vunpack.c.l.b16 %v1502
        %v1518 = vunpack.c.l.b16 %v1503
        %v1519 = vpack.c.b16 %v1516, %v1515
        %v1520 = vpack.c.b16 %v1518, %v1517
        %v1524 = vsel %vm899, %v1499, 0
        %1526 = vmatprep.subr.bf16.mxu0 0
        %1527 = vmatpush1.bf16.msra.mxu0 %v1519
        %1528 = vmatprep.subr.bf16.mxu0 0
        %1529 = vmatpush1.bf16.msra.mxu0 %v1520
        %1530 = vmatprep.subr.bf16.mxu0 0
        %1531 = vmatpush1.bf16.msra.mxu0 0
        %1532 = vmatprep.subr.bf16.mxu0 0
        %1533 = vmatpush1.bf16.msra.mxu0 0
        %1534 = vmatprep.subr.bf16.mxu0 0
        %1535 = vmatpush1.bf16.msra.mxu0 0
        %1536 = vmatprep.subr.bf16.mxu0 0
        %1537 = vmatpush1.bf16.msra.mxu0 0
        %1538 = vmatprep.subr.bf16.mxu0 0
        %1539 = vmatpush1.bf16.msra.mxu0 0
        %1540 = vmatprep.subr.bf16.mxu0 0
        %1541 = vmatpush1.bf16.msra.mxu0 0
        %1542 = vmatprep.subr.bf16.mxu0 0
        %1543 = vmatpush1.bf16.msra.mxu0 0
        %1544 = vmatprep.subr.bf16.mxu0 0
        %1545 = vmatpush1.bf16.msra.mxu0 0
        %1546 = vmatprep.subr.bf16.mxu0 0
        %1547 = vmatpush1.bf16.msra.mxu0 0
        %1548 = vmatprep.subr.bf16.mxu0 0
        %1549 = vmatpush1.bf16.msra.mxu0 0
        %1550 = vmatprep.subr.bf16.mxu0 0
        %1551 = vmatpush1.bf16.msra.mxu0 0
        %1552 = vmatprep.subr.bf16.mxu0 0
        %1553 = vmatpush1.bf16.msra.mxu0 0
        %1554 = vmatprep.subr.bf16.mxu0 0
        %1555 = vmatpush1.bf16.msra.mxu0 0
        %1556 = vmatprep.subr.bf16.mxu0 0
        %1557 = vmatpush1.bf16.msra.mxu0 0
        %1558 = vmatprep.mubr.bf16.mxu0 0
        %1559 = vmatmul.mubr.bf16.gmra.mrb[0].mxu0 %v1524
        %v1560 = vpop.f32.mrb[0].mxu0
        %v1561 = vadd.f32 %v1509, %v1560
        %v1562 = vpop.f32.mrb[0].mxu0
        %v1563 = vpop.f32.mrb[0].mxu0
        %v1564 = vpop.f32.mrb[0].mxu0
        %1565 = vdwg.mxu0
        %v1566 = vadd.f32 %v896, %v1561
        %v1567 = vld [vmem:[#allocation20] sm:$0x1]
        %v1568 = vld [vmem:[#allocation22] sm:$0x1]
        %v1569 = vsel %vm899, %v1566, 0.0
        %1570 = vadd.xlane.f32.xlu0 %v1569
        %v1571 = vpop.xlane.xlu0 %1570
        %v1572 = vmul.f32 %v1571, %v903
        %v1573 = vsub.f32 %v1566, %v1572
        %v1574 = vmul.f32 %v1573, %v1573
        %v1575 = vsel %vm899, %v1574, 0.0
        %1576 = vadd.xlane.f32.xlu0 %v1575
        %v1577 = vpop.xlane.xlu0 %1576
        %v1578 = vmul.f32 %v1577, %v903
        %v1579 = vadd.f32 %v1578, 1e-05
        %v1580 = vrsqrt.pop %v1579
        %v1581 = vmul.f32 %v1573, %v1580
        %v1583 = vlaneseq
        %v1584 = vshrl.u32 %v1583, 7
        %v1585 = vsub.s32 0, %v1584
        %v1586 = vrot.slane %v1567, %v1585
        %v1588 = vmul.f32 %v1586, %v1581
        %v1590 = vlaneseq
        %v1591 = vshrl.u32 %v1590, 7
        %v1592 = vsub.s32 0, %v1591
        %v1593 = vrot.slane %v1568, %v1592
        %v1595 = vadd.f32 %v1588, %v1593
        %v1596 = vpack.c.bf16 %v1595, %v1595
        %v1597 = vld [vmem:[#allocation23] sm:$0xf]
        %v1598 = vld [vmem:[#allocation23 + $0x4] sm:$0xf]
        %v1599 = vld [vmem:[#allocation23 + $0x8] sm:$0xf]
        %v1600 = vld [vmem:[#allocation23 + $0xc] sm:$0xf]
        %v1601 = vld [vmem:[#allocation25] sm:$0x1]
        %v1603 = vlaneseq
        %v1604 = vshrl.u32 %v1603, 7
        %v1605 = vsub.s32 0, %v1604
        %v1606 = vrot.slane %v1601, %v1605
        %v1612 = vunpack.c.l.b16 %v1597
        %v1613 = vunpack.c.l.b16 %v1598
        %v1614 = vunpack.c.l.b16 %v1599
        %v1615 = vunpack.c.l.b16 %v1600
        %v1616 = vpack.c.b16 %v1613, %v1612
        %v1617 = vpack.c.b16 %v1615, %v1614
        %v1621 = vsel %vm899, %v1596, 0
        %1623 = vmatprep.subr.bf16.mxu0 0
        %1624 = vmatpush1.bf16.msra.mxu0 %v1616
        %1625 = vmatprep.subr.bf16.mxu0 0
        %1626 = vmatpush1.bf16.msra.mxu0 %v1617
        %1627 = vmatprep.subr.bf16.mxu0 0
        %1628 = vmatpush1.bf16.msra.mxu0 0
        %1629 = vmatprep.subr.bf16.mxu0 0
        %1630 = vmatpush1.bf16.msra.mxu0 0
        %1631 = vmatprep.subr.bf16.mxu0 0
        %1632 = vmatpush1.bf16.msra.mxu0 0
        %1633 = vmatprep.subr.bf16.mxu0 0
        %1634 = vmatpush1.bf16.msra.mxu0 0
        %1635 = vmatprep.subr.bf16.mxu0 0
        %1636 = vmatpush1.bf16.msra.mxu0 0
        %1637 = vmatprep.subr.bf16.mxu0 0
        %1638 = vmatpush1.bf16.msra.mxu0 0
        %1639 = vmatprep.subr.bf16.mxu0 0
        %1640 = vmatpush1.bf16.msra.mxu0 0
        %1641 = vmatprep.subr.bf16.mxu0 0
        %1642 = vmatpush1.bf16.msra.mxu0 0
        %1643 = vmatprep.subr.bf16.mxu0 0
        %1644 = vmatpush1.bf16.msra.mxu0 0
        %1645 = vmatprep.subr.bf16.mxu0 0
        %1646 = vmatpush1.bf16.msra.mxu0 0
        %1647 = vmatprep.subr.bf16.mxu0 0
        %1648 = vmatpush1.bf16.msra.mxu0 0
        %1649 = vmatprep.subr.bf16.mxu0 0
        %1650 = vmatpush1.bf16.msra.mxu0 0
        %1651 = vmatprep.subr.bf16.mxu0 0
        %1652 = vmatpush1.bf16.msra.mxu0 0
        %1653 = vmatprep.subr.bf16.mxu0 0
        %1654 = vmatpush1.bf16.msra.mxu0 0
        %1655 = vmatprep.mubr.bf16.mxu0 0
        %1656 = vmatmul.mubr.bf16.gmra.mrb[0].mxu0 %v1621
        %v1657 = vpop.f32.mrb[0].mxu0
        %v1658 = vadd.f32 %v1606, %v1657
        %v1659 = vpop.f32.mrb[0].mxu0
        %v1660 = vpop.f32.mrb[0].mxu0
        %v1661 = vpop.f32.mrb[0].mxu0
        %1662 = vdwg.mxu0
        %v1663 = vmul.f32 %v1658, 0.5
        %v1664 = vmul.f32 %v1658, 0.044715
        %v1665 = vmul.f32 %v1664, %v1658
        %v1666 = vmul.f32 %v1665, %v1658
        %v1667 = vadd.f32 %v1658, %v1666
        %v1668 = vmul.f32 %v1667, 0.7978846
        %v1669 = vtanh.pop %v1668
        %v1670 = vadd.f32 %v1669, 1.0
        %v1671 = vmul.f32 %v1663, %v1670
        %v1672 = vpack.c.bf16 %v1671, %v1671
        %v1673 = vld [vmem:[#allocation26] sm:$0xf]
        %v1674 = vld [vmem:[#allocation26 + $0x4] sm:$0xf]
        %v1675 = vld [vmem:[#allocation26 + $0x8] sm:$0xf]
        %v1676 = vld [vmem:[#allocation26 + $0xc] sm:$0xf]
        %v1677 = vld [vmem:[#allocation26 + $0x10] sm:$0xf]
        %v1678 = vld [vmem:[#allocation26 + $0x14] sm:$0xf]
        %v1679 = vld [vmem:[#allocation26 + $0x18] sm:$0xf]
        %v1680 = vld [vmem:[#allocation26 + $0x1c] sm:$0xf]
        %v1681 = vld [vmem:[#allocation26 + $0x20] sm:$0xf]
        %v1682 = vld [vmem:[#allocation26 + $0x24] sm:$0xf]
        %v1683 = vld [vmem:[#allocation26 + $0x28] sm:$0xf]
        %v1684 = vld [vmem:[#allocation26 + $0x2c] sm:$0xf]
        %v1685 = vld [vmem:[#allocation26 + $0x30] sm:$0xf]
        %v1686 = vld [vmem:[#allocation26 + $0x34] sm:$0xf]
        %v1687 = vld [vmem:[#allocation26 + $0x38] sm:$0xf]
        %v1688 = vld [vmem:[#allocation26 + $0x3c] sm:$0xf]
        %v1689 = vld [vmem:[#allocation28] sm:$0x1]
        %v1691 = vlaneseq
        %v1692 = vshrl.u32 %v1691, 7
        %v1693 = vsub.s32 0, %v1692
        %v1694 = vrot.slane %v1689, %v1693
        %v1712 = vunpack.c.l.b16 %v1673
        %v1713 = vunpack.c.l.b16 %v1674
        %v1714 = vunpack.c.l.b16 %v1675
        %v1715 = vunpack.c.l.b16 %v1676
        %v1716 = vunpack.c.l.b16 %v1677
        %v1717 = vunpack.c.l.b16 %v1678
        %v1718 = vunpack.c.l.b16 %v1679
        %v1719 = vunpack.c.l.b16 %v1680
        %v1720 = vunpack.c.l.b16 %v1681
        %v1721 = vunpack.c.l.b16 %v1682
        %v1722 = vunpack.c.l.b16 %v1683
        %v1723 = vunpack.c.l.b16 %v1684
        %v1724 = vunpack.c.l.b16 %v1685
        %v1725 = vunpack.c.l.b16 %v1686
        %v1726 = vunpack.c.l.b16 %v1687
        %v1727 = vunpack.c.l.b16 %v1688
        %v1728 = vpack.c.b16 %v1713, %v1712
        %v1729 = vpack.c.b16 %v1715, %v1714
        %v1730 = vpack.c.b16 %v1717, %v1716
        %v1731 = vpack.c.b16 %v1719, %v1718
        %v1732 = vpack.c.b16 %v1721, %v1720
        %v1733 = vpack.c.b16 %v1723, %v1722
        %v1734 = vpack.c.b16 %v1725, %v1724
        %v1735 = vpack.c.b16 %v1727, %v1726
        %1744 = vmatprep.subr.bf16.mxu0 0
        %1745 = vmatpush1.bf16.msra.mxu0 %v1728
        %1746 = vmatprep.subr.bf16.mxu0 0
        %1747 = vmatpush1.bf16.msra.mxu0 %v1729
        %1748 = vmatprep.subr.bf16.mxu0 0
        %1749 = vmatpush1.bf16.msra.mxu0 %v1730
        %1750 = vmatprep.subr.bf16.mxu0 0
        %1751 = vmatpush1.bf16.msra.mxu0 %v1731
        %1752 = vmatprep.subr.bf16.mxu0 0
        %1753 = vmatpush1.bf16.msra.mxu0 %v1732
        %1754 = vmatprep.subr.bf16.mxu0 0
        %1755 = vmatpush1.bf16.msra.mxu0 %v1733
        %1756 = vmatprep.subr.bf16.mxu0 0
        %1757 = vmatpush1.bf16.msra.mxu0 %v1734
        %1758 = vmatprep.subr.bf16.mxu0 0
        %1759 = vmatpush1.bf16.msra.mxu0 %v1735
        %1760 = vmatprep.subr.bf16.mxu0 0
        %1761 = vmatpush1.bf16.msra.mxu0 0
        %1762 = vmatprep.subr.bf16.mxu0 0
        %1763 = vmatpush1.bf16.msra.mxu0 0
        %1764 = vmatprep.subr.bf16.mxu0 0
        %1765 = vmatpush1.bf16.msra.mxu0 0
        %1766 = vmatprep.subr.bf16.mxu0 0
        %1767 = vmatpush1.bf16.msra.mxu0 0
        %1768 = vmatprep.subr.bf16.mxu0 0
        %1769 = vmatpush1.bf16.msra.mxu0 0
        %1770 = vmatprep.subr.bf16.mxu0 0
        %1771 = vmatpush1.bf16.msra.mxu0 0
        %1772 = vmatprep.subr.bf16.mxu0 0
        %1773 = vmatpush1.bf16.msra.mxu0 0
        %1774 = vmatprep.subr.bf16.mxu0 0
        %1775 = vmatpush1.bf16.msra.mxu0 0
        %1776 = vmatprep.mubr.bf16.mxu0 0
        %1777 = vmatmul.mubr.bf16.gmra.mrb[0].mxu0 %v1672
        %v1778 = vpop.f32.mrb[0].mxu0
        %v1779 = vadd.f32 %v1694, %v1778
        %v1780 = vpop.f32.mrb[0].mxu0
        %v1781 = vpop.f32.mrb[0].mxu0
        %v1782 = vpop.f32.mrb[0].mxu0
        %1783 = vdwg.mxu0
        %v1784 = vadd.f32 %v1566, %v1779
        %1785 = vst.msk [vmem:[%s737] sm:$0xff] %vm899, %v1784
        %s1786 = sand.u32 %s390, 1
        %s1787 = scalar_lea.sflag [#allocation7], %s1786
        %s1788 = sand.u32 %s390, 1
        %s1789 = smul.addr %s1788, 8
        %s1790 = scalar_lea.vmem [#allocation29], %s1789
        // Predicated region
        $region145: #{tpu_custom_call.1} parent=79 // pred_check
          %p1791 = pneg %p400
        $region146: #{tpu_custom_call.1} parent=79 // pred_check_branch
          %1793 = sbr.rel (%p1791) target = $region148
        $region147: #{tpu_custom_call.1} parent=79 // pred_region
          %s1795 = ssub.s32 128, 128
          %1796 = vsyncadd %s1787, %s1795
          %s1797 = sadd.s32 %s46, %s45
          %s1798 = smul.addr %s1797, 128
          %s1799 = scalar_lea.hbm %s15, %s1798
          %s1801 = sshll.u32 %s1790, 4
          %s1802 = int_to_ptr.vmem [resolvable:$true] %s1801
          %1804 = dma.vmem_to_hbm [thread:$0]  %s1802, 128, %s1799, %s1787
        $region148: #{tpu_custom_call.1} parent=79 // pred_fallthru
          _
      $region80: #{tpu_custom_call.1} parent=5 // pred_fallthru
        _
      %p1805 = scmp.le.s32.totalorder 2, %s36
      // Predicated region
      $region149: #{tpu_custom_call.1} parent=5 // pred_check
        %p1806 = pneg %p1805
      $region150: #{tpu_custom_call.1} parent=5 // pred_check_branch
        %1808 = sbr.rel (%p1806) target = $region152
      $region151: #{tpu_custom_call.1} parent=5 // pred_region
        %s1809 = ssub.s32 %s36, 2
        // Predicated region
        $region153: #{tpu_custom_call.1} parent=151 // pred_check
          %p1810 = pneg %p406
        $region154: #{tpu_custom_call.1} parent=151 // pred_check_branch
          %1812 = sbr.rel (%p1810) target = $region156
        $region155: #{tpu_custom_call.1} parent=151 // pred_region
          %s1813 = sand.u32 %s391, 1
          %s1814 = scalar_lea.sflag [#allocation7], %s1813
          %s1815 = sand.u32 %s391, 1
          %s1816 = smul.addr %s1815, 8
          %s1817 = scalar_lea.vmem [#allocation29], %s1816
          %1818 = dma.done %s1814, 128
        $region156: #{tpu_custom_call.1} parent=151 // pred_fallthru
          _
      $region152: #{tpu_custom_call.1} parent=5 // pred_fallthru
        _
    $region6: #{tpu_custom_call.1} parent=1 // loop_footer
      %s40 = sadd.s32 1, %s36
    $region7: #{tpu_custom_call.1} parent=1 // loop_footer_branch
      %35 = sbr.rel target = $region3
    $region8: #{tpu_custom_call.1} parent=1 // loop_exit
      _
    %1819 = vsyncpa [#allocation6], 1
    %s1820 = scalar_lea.sflag [#allocation6], 1
    %1821 = vsyncpa %s1820, 1
    %1822 = vsyncpa [#allocation9], 1
    %s1823 = scalar_lea.sflag [#allocation9], 1
    %1824 = vsyncpa %s1823, 1
    %1825 = vsyncpa [#allocation12], 1
    %1826 = vsyncpa [#allocation15], 1
    %1827 = vsyncpa [#allocation18], 1
    %1828 = vsyncpa [#allocation21], 1
    %1829 = vsyncpa [#allocation24], 1
    %1830 = vsyncpa [#allocation27], 1
    %1831 = vsyncpa [#allocation7], 1
    %s1832 = scalar_lea.sflag [#allocation7], 1
    %1833 = vsyncpa %s1832, 1

</llo_original>
